<compile_context>
chip_gen: v5e
topology: v5e:2x2
jax: 0.10.0
libtpu: 0.0.40
codegen_flags: <defaults>
</compile_context>

<pallas_src>
import jax
import jax.numpy as jnp
from jax.experimental import pallas as pl
from jax.experimental.pallas import tpu as pltpu

HIDDEN = 256          # matches the original module's hidden_size
VOCAB = 64
SEQ_LEN = 8


def _encoder_gru_seq_kernel(tok_ref,        # SMEM scalar-prefetch: (T,) int32 token ids
                            emb_ref,        # (VOCAB, H) VMEM-resident embedding table
                            h0_ref,         # (1, H)     initial hidden
                            w_ih_t_ref,     # (H, 3H)
                            w_hh_t_ref,     # (H, 3H)
                            b_ih_ref,       # (1, 3H)
                            b_hh_ref,       # (1, 3H)
                            out_ref,        # (T, H)     per-step GRU output (== hidden)
                            xs_ref,         # scratch (T, H)  gathered embeddings
                            gi_ref,         # scratch (T, 3H) input projections
                            h_ref):         # scratch (1, H)  carried hidden
    T, H = out_ref.shape

    # ---- 1) Embedding lookup: dynamic sublane gather from the resident table. ----
    @pl.loop(0, T)
    def _(t):
        xs_ref[pl.ds(t, 1), :] = emb_ref[pl.ds(tok_ref[t], 1), :]

    # ---- 2) Input projection for the whole sequence in ONE MXU call. ----
    gi_ref[...] = (
        jnp.dot(xs_ref[...], w_ih_t_ref[...], preferred_element_type=jnp.float32)
        + b_ih_ref[...])

    # ---- 3) Recurrence: only the hidden-dependent matmul stays per step. ----
    h_ref[...] = h0_ref[...].astype(jnp.float32)

    @pl.loop(0, T)
    def _(t):
        h = h_ref[...]                                                  # (1, H)
        gi = gi_ref[pl.ds(t, 1), :]                                     # (1, 3H)
        gh = (jnp.dot(h, w_hh_t_ref[...], preferred_element_type=jnp.float32)
              + b_hh_ref[...])                                          # (1, 3H)

        # PyTorch nn.GRU gate order: reset, update, new.
        i_r, i_z, i_n = gi[:, 0:H], gi[:, H:2 * H], gi[:, 2 * H:3 * H]
        h_r, h_z, h_n = gh[:, 0:H], gh[:, H:2 * H], gh[:, 2 * H:3 * H]

        r = jax.nn.sigmoid(i_r + h_r)
        z = jax.nn.sigmoid(i_z + h_z)
        n = jnp.tanh(i_n + r * h_n)               # b_hn stays inside r*(...), as in PyTorch
        h_new = (1.0 - z) * n + z * h

        out_ref[pl.ds(t, 1), :] = h_new.astype(out_ref.dtype)
        h_ref[...] = h_new


def prepare_params(params):
    """One-time layout prep (pre-transpose / reshape) so the per-call path is clean."""
    return {
        "embedding": params["embedding"],                 # (VOCAB, H)
        "w_ih_t": params["w_ih"].T,                       # (H, 3H)
        "w_hh_t": params["w_hh"].T,                       # (H, 3H)
        "b_ih": params["b_ih"].reshape(1, -1),            # (1, 3H)
        "b_hh": params["b_hh"].reshape(1, -1),            # (1, 3H)
    }


def encoder_rnn_forward(tokens, hidden, prepared):
    """Runs EncoderRNN.forward over a token sequence in one Pallas launch.

    tokens  : (T,) int32 token ids (T == 1 reproduces the original single-step forward)
    hidden  : (1, 1, H) float32 initial hidden
    returns : outputs (T, 1, H), hidden (1, 1, H)  -- hidden == outputs[-1]
    """
    tokens = jnp.asarray(tokens, dtype=jnp.int32).reshape(-1)
    T = tokens.shape[0]
    H = hidden.shape[-1]
    h0 = hidden.reshape(1, H).astype(jnp.float32)

    emb = prepared["embedding"]
    w_ih_t = prepared["w_ih_t"]
    w_hh_t = prepared["w_hh_t"]
    b_ih = prepared["b_ih"]
    b_hh = prepared["b_hh"]
    V = emb.shape[0]

    grid_spec = pltpu.PrefetchScalarGridSpec(
        num_scalar_prefetch=1,           # token ids -> SMEM, indexed inside the kernel
        grid=(1,),
        in_specs=[
            pl.BlockSpec((V, H), lambda i, tok: (0, 0)),        # embedding, resident
            pl.BlockSpec((1, H), lambda i, tok: (0, 0)),        # h0
            pl.BlockSpec((H, 3 * H), lambda i, tok: (0, 0)),    # W_ih^T, resident
            pl.BlockSpec((H, 3 * H), lambda i, tok: (0, 0)),    # W_hh^T, resident
            pl.BlockSpec((1, 3 * H), lambda i, tok: (0, 0)),    # b_ih
            pl.BlockSpec((1, 3 * H), lambda i, tok: (0, 0)),    # b_hh
        ],
        out_specs=pl.BlockSpec((T, H), lambda i, tok: (0, 0)),
        scratch_shapes=[
            pltpu.VMEM((T, H), jnp.float32),        # gathered embeddings
            pltpu.VMEM((T, 3 * H), jnp.float32),    # hoisted input projections
            pltpu.VMEM((1, H), jnp.float32),        # carried hidden state
        ],
    )

    outs = pl.pallas_call(
        _encoder_gru_seq_kernel,
        out_shape=jax.ShapeDtypeStruct((T, H), jnp.float32),
        grid_spec=grid_spec,
        compiler_params=pltpu.CompilerParams(
            dimension_semantics=("arbitrary",)),
    )(tokens, emb, h0, w_ih_t, w_hh_t, b_ih, b_hh)

    outputs = outs.reshape(T, 1, H)               # PyTorch per-step output is (1, 1, H)
    new_hidden = outs[T - 1].reshape(1, 1, H)     # hidden == last output row (no dup output)
    return outputs, new_hidden


def _reference_forward(tokens, hidden, params):
    """Pure-JAX reference of the same per-token GRU math (validation only)."""
    H = hidden.shape[-1]
    hp = jax.lax.Precision.HIGHEST

    def step(h, tok):
        x = params["embedding"][tok].reshape(1, H)
        gi = jnp.dot(x, params["w_ih"].T, precision=hp) + params["b_ih"]
        gh = jnp.dot(h, params["w_hh"].T, precision=hp) + params["b_hh"]
        i_r, i_z, i_n = gi[:, :H], gi[:, H:2 * H], gi[:, 2 * H:]
        h_r, h_z, h_n = gh[:, :H], gh[:, H:2 * H], gh[:, 2 * H:]
        r = jax.nn.sigmoid(i_r + h_r)
        z = jax.nn.sigmoid(i_z + h_z)
        n = jnp.tanh(i_n + r * h_n)
        h_new = (1.0 - z) * n + z * h
        return h_new, h_new

    h_last, outs = jax.lax.scan(step, hidden.reshape(1, H), tokens)
    return outs.reshape(-1, 1, H), h_last.reshape(1, 1, H)


def init_params(key, vocab_size, hidden_size):
    k_emb, k_wih, k_whh, k_bih, k_bhh = jax.random.split(key, 5)
    bound = 1.0 / jnp.sqrt(hidden_size)
    return {
        # nn.Embedding default init: N(0, 1)
        "embedding": jax.random.normal(k_emb, (vocab_size, hidden_size), jnp.float32),
        # nn.GRU default init: U(-1/sqrt(H), 1/sqrt(H)), gate order (r, z, n)
        "w_ih": jax.random.uniform(k_wih, (3 * hidden_size, hidden_size),
                                   jnp.float32, -bound, bound),
        "w_hh": jax.random.uniform(k_whh, (3 * hidden_size, hidden_size),
                                   jnp.float32, -bound, bound),
        "b_ih": jax.random.uniform(k_bih, (3 * hidden_size,),
                                   jnp.float32, -bound, bound),
        "b_hh": jax.random.uniform(k_bhh, (3 * hidden_size,),
                                   jnp.float32, -bound, bound),
    }


if __name__ == "__main__":
    key = jax.random.PRNGKey(0)
    k_params, k_hidden, k_tok = jax.random.split(key, 3)

    params = init_params(k_params, VOCAB, HIDDEN)
    prepared = prepare_params(params)               # one-time layout prep (review #5)

    tokens = jax.random.randint(k_tok, (SEQ_LEN,), 0, VOCAB, dtype=jnp.int32)
    # EncoderRNN.initHidden() is zeros; use a random hidden to exercise the gates.
    hidden = jax.random.normal(k_hidden, (1, 1, HIDDEN), jnp.float32)

    outputs, new_hidden = encoder_rnn_forward(tokens, hidden, prepared)
    jax.block_until_ready((outputs, new_hidden))

    ref_out, ref_hidden = _reference_forward(tokens, hidden, params)
    assert outputs.shape == (SEQ_LEN, 1, HIDDEN)
    assert new_hidden.shape == (1, 1, HIDDEN)
    # Tolerance covers possible matmul-precision differences between the Pallas
    # MXU path and the XLA reference; real semantic bugs produce O(1e-1) errors.
    assert jnp.allclose(outputs, ref_out, atol=5e-3, rtol=5e-3)
    assert jnp.allclose(new_hidden, ref_hidden, atol=5e-3, rtol=5e-3)

    print("KERNEL_OK")
</pallas_src>

<mosaic_0001>
module attributes {stable_mosaic.version = 11 : i64} {
  func.func @_encoder_gru_seq_kernel(%arg0: i32, %arg1: memref<8xi32, #tpu.memory_space<smem>>, %arg2: memref<64x256xf32, #tpu.memory_space<vmem>>, %arg3: memref<1x256xf32, #tpu.memory_space<vmem>>, %arg4: memref<256x768xf32, #tpu.memory_space<vmem>>, %arg5: memref<256x768xf32, #tpu.memory_space<vmem>>, %arg6: memref<1x768xf32, #tpu.memory_space<vmem>>, %arg7: memref<1x768xf32, #tpu.memory_space<vmem>>, %arg8: memref<8x256xf32, #tpu.memory_space<vmem>>, %arg9: memref<8x256xf32, #tpu.memory_space<vmem>>, %arg10: memref<8x768xf32, #tpu.memory_space<vmem>>, %arg11: memref<1x256xf32, #tpu.memory_space<vmem>>) attributes {dimension_semantics = [#tpu.dimension_semantics<arbitrary>], iteration_bounds = array<i64: 1>, scalar_prefetch = 1 : i64, scratch_operands = 3 : i64, tpu.core_type = #tpu.core_type<tc>, window_params = [{pipeline_mode = #tpu.pipeline_mode<synchronous>, transform_indices = @transform_0, window_bounds = array<i64: 64, 256>}, {pipeline_mode = #tpu.pipeline_mode<synchronous>, transform_indices = @transform_1, window_bounds = array<i64: 1, 256>}, {pipeline_mode = #tpu.pipeline_mode<synchronous>, transform_indices = @transform_2, window_bounds = array<i64: 256, 768>}, {pipeline_mode = #tpu.pipeline_mode<synchronous>, transform_indices = @transform_3, window_bounds = array<i64: 256, 768>}, {pipeline_mode = #tpu.pipeline_mode<synchronous>, transform_indices = @transform_4, window_bounds = array<i64: 1, 768>}, {pipeline_mode = #tpu.pipeline_mode<synchronous>, transform_indices = @transform_5, window_bounds = array<i64: 1, 768>}, {pipeline_mode = #tpu.pipeline_mode<synchronous>, transform_indices = @transform_6, window_bounds = array<i64: 8, 256>}]} {
    %c0_i32 = arith.constant 0 : i32
    %c8_i32 = arith.constant 8 : i32
    %0 = arith.addi %c0_i32, %c8_i32 : i32
    %c1_i32 = arith.constant 1 : i32
    scf.for %arg12 = %c0_i32 to %0 step %c1_i32  : i32 {
      %c1_i32_16 = arith.constant 1 : i32
      %11 = arith.muli %arg12, %c1_i32_16 : i32
      %c0_i32_17 = arith.constant 0 : i32
      %12 = arith.addi %c0_i32_17, %11 : i32
      %13 = arith.index_cast %12 : i32 to index
      %14 = memref.load %arg1[%13] : memref<8xi32, #tpu.memory_space<smem>>
      %15 = arith.index_cast %14 : i32 to index
      %c0_18 = arith.constant 0 : index
      %16 = vector.load %arg2[%15, %c0_18] : memref<64x256xf32, #tpu.memory_space<vmem>>, vector<1x256xf32>
      %17 = arith.index_cast %12 : i32 to index
      %c0_19 = arith.constant 0 : index
      %18 = vector.load %arg9[%17, %c0_19] : memref<8x256xf32, #tpu.memory_space<vmem>>, vector<1x256xf32>
      tpu.vector_store %arg9[%17, %c0_19], %16 {strides = array<i32>} : memref<8x256xf32, #tpu.memory_space<vmem>>, vector<1x256xf32>,
    }
    %c8_i32_0 = arith.constant 8 : i32
    %c0 = arith.constant 0 : index
    %c0_1 = arith.constant 0 : index
    %1 = vector.load %arg9[%c0, %c0_1] : memref<8x256xf32, #tpu.memory_space<vmem>>, vector<8x256xf32>
    %c0_2 = arith.constant 0 : index
    %c0_3 = arith.constant 0 : index
    %2 = vector.load %arg4[%c0_2, %c0_3] : memref<256x768xf32, #tpu.memory_space<vmem>>, vector<256x768xf32>
    %cst = arith.constant dense<0.000000e+00> : vector<8x768xf32>
    %3 = tpu.matmul %1, %2, %cst {dimension_numbers = #tpu.dot_dimension_numbers<[1], [0], [0], [1], [0, 0, 1, 1], [], []>} : vector<8x256xf32>, vector<256x768xf32>, vector<8x768xf32> -> vector<8x768xf32>
    %c0_4 = arith.constant 0 : index
    %c0_5 = arith.constant 0 : index
    %4 = vector.load %arg6[%c0_4, %c0_5] : memref<1x768xf32, #tpu.memory_space<vmem>>, vector<1x768xf32>
    %5 = vector.broadcast %4 : vector<1x768xf32> to vector<8x768xf32>
    %6 = arith.addf %3, %5 : vector<8x768xf32>
    %c0_6 = arith.constant 0 : index
    %c0_7 = arith.constant 0 : index
    %7 = vector.load %arg10[%c0_6, %c0_7] : memref<8x768xf32, #tpu.memory_space<vmem>>, vector<8x768xf32>
    tpu.vector_store %arg10[%c0_6, %c0_7], %6 {strides = array<i32>} : memref<8x768xf32, #tpu.memory_space<vmem>>, vector<8x768xf32>,
    %c0_8 = arith.constant 0 : index
    %c0_9 = arith.constant 0 : index
    %8 = vector.load %arg3[%c0_8, %c0_9] : memref<1x256xf32, #tpu.memory_space<vmem>>, vector<1x256xf32>
    %c0_10 = arith.constant 0 : index
    %c0_11 = arith.constant 0 : index
    %9 = vector.load %arg11[%c0_10, %c0_11] : memref<1x256xf32, #tpu.memory_space<vmem>>, vector<1x256xf32>
    tpu.vector_store %arg11[%c0_10, %c0_11], %8 {strides = array<i32>} : memref<1x256xf32, #tpu.memory_space<vmem>>, vector<1x256xf32>,
    %c0_i32_12 = arith.constant 0 : i32
    %c8_i32_13 = arith.constant 8 : i32
    %10 = arith.addi %c0_i32_12, %c8_i32_13 : i32
    %c1_i32_14 = arith.constant 1 : i32
    scf.for %arg12 = %c0_i32_12 to %10 step %c1_i32_14  : i32 {
      %c1_i32_16 = arith.constant 1 : i32
      %11 = arith.muli %arg12, %c1_i32_16 : i32
      %c0_i32_17 = arith.constant 0 : i32
      %12 = arith.addi %c0_i32_17, %11 : i32
      %c0_18 = arith.constant 0 : index
      %c0_19 = arith.constant 0 : index
      %13 = vector.load %arg11[%c0_18, %c0_19] : memref<1x256xf32, #tpu.memory_space<vmem>>, vector<1x256xf32>
      %14 = arith.index_cast %12 : i32 to index
      %c0_20 = arith.constant 0 : index
      %15 = vector.load %arg10[%14, %c0_20] : memref<8x768xf32, #tpu.memory_space<vmem>>, vector<1x768xf32>
      %c0_21 = arith.constant 0 : index
      %c0_22 = arith.constant 0 : index
      %16 = vector.load %arg5[%c0_21, %c0_22] : memref<256x768xf32, #tpu.memory_space<vmem>>, vector<256x768xf32>
      %cst_23 = arith.constant dense<0.000000e+00> : vector<1x768xf32>
      %17 = tpu.matmul %13, %16, %cst_23 {dimension_numbers = #tpu.dot_dimension_numbers<[1], [0], [0], [1], [0, 0, 1, 1], [], []>} : vector<1x256xf32>, vector<256x768xf32>, vector<1x768xf32> -> vector<1x768xf32>
      %c0_24 = arith.constant 0 : index
      %c0_25 = arith.constant 0 : index
      %18 = vector.load %arg7[%c0_24, %c0_25] : memref<1x768xf32, #tpu.memory_space<vmem>>, vector<1x768xf32>
      %19 = arith.addf %17, %18 : vector<1x768xf32>
      %20 = vector.extract_strided_slice %15 {offsets = [0, 0], sizes = [1, 256], strides = [1, 1]} : vector<1x768xf32> to vector<1x256xf32>
      %21 = vector.extract_strided_slice %15 {offsets = [0, 256], sizes = [1, 256], strides = [1, 1]} : vector<1x768xf32> to vector<1x256xf32>
      %22 = vector.extract_strided_slice %15 {offsets = [0, 512], sizes = [1, 256], strides = [1, 1]} : vector<1x768xf32> to vector<1x256xf32>
      %23 = vector.extract_strided_slice %19 {offsets = [0, 0], sizes = [1, 256], strides = [1, 1]} : vector<1x768xf32> to vector<1x256xf32>
      %24 = vector.extract_strided_slice %19 {offsets = [0, 256], sizes = [1, 256], strides = [1, 1]} : vector<1x768xf32> to vector<1x256xf32>
      %25 = vector.extract_strided_slice %19 {offsets = [0, 512], sizes = [1, 256], strides = [1, 1]} : vector<1x768xf32> to vector<1x256xf32>
      %26 = arith.addf %20, %23 : vector<1x256xf32>
      %27 = arith.negf %26 : vector<1x256xf32>
      %28 = math.exp %27 : vector<1x256xf32>
      %cst_26 = arith.constant 1.000000e+00 : f32
      %29 = vector.broadcast %cst_26 : f32 to vector<1x256xf32>
      %30 = arith.addf %29, %28 : vector<1x256xf32>
      %31 = arith.divf %29, %30 : vector<1x256xf32>
      %32 = arith.addf %21, %24 : vector<1x256xf32>
      %33 = arith.negf %32 : vector<1x256xf32>
      %34 = math.exp %33 : vector<1x256xf32>
      %cst_27 = arith.constant 1.000000e+00 : f32
      %35 = vector.broadcast %cst_27 : f32 to vector<1x256xf32>
      %36 = arith.addf %35, %34 : vector<1x256xf32>
      %37 = arith.divf %35, %36 : vector<1x256xf32>
      %38 = arith.mulf %31, %25 : vector<1x256xf32>
      %39 = arith.addf %22, %38 : vector<1x256xf32>
      %40 = math.tanh %39 : vector<1x256xf32>
      %cst_28 = arith.constant 1.000000e+00 : f32
      %41 = vector.broadcast %cst_28 : f32 to vector<1x256xf32>
      %42 = arith.subf %41, %37 : vector<1x256xf32>
      %43 = arith.mulf %42, %40 : vector<1x256xf32>
      %44 = arith.mulf %37, %13 : vector<1x256xf32>
      %45 = arith.addf %43, %44 : vector<1x256xf32>
      %46 = arith.index_cast %12 : i32 to index
      %c0_29 = arith.constant 0 : index
      %47 = vector.load %arg8[%46, %c0_29] : memref<8x256xf32, #tpu.memory_space<vmem>>, vector<1x256xf32>
      tpu.vector_store %arg8[%46, %c0_29], %45 {strides = array<i32>} : memref<8x256xf32, #tpu.memory_space<vmem>>, vector<1x256xf32>,
      %c0_30 = arith.constant 0 : index
      %c0_31 = arith.constant 0 : index
      %48 = vector.load %arg11[%c0_30, %c0_31] : memref<1x256xf32, #tpu.memory_space<vmem>>, vector<1x256xf32>
      tpu.vector_store %arg11[%c0_30, %c0_31], %45 {strides = array<i32>} : memref<1x256xf32, #tpu.memory_space<vmem>>, vector<1x256xf32>,
    }
    %c8_i32_15 = arith.constant 8 : i32
    return
  }
  func.func @transform_0(%arg0: i32, %arg1: memref<8xi32, #tpu.memory_space<smem>>) -> (i32, i32) {
    %c0_i32 = arith.constant 0 : i32
    %c0_i32_0 = arith.constant 0 : i32
    %c0_i32_1 = arith.constant 0 : i32
    return %c0_i32, %c0_i32_0 : i32, i32
  }
  func.func @transform_1(%arg0: i32, %arg1: memref<8xi32, #tpu.memory_space<smem>>) -> (i32, i32) {
    %c0_i32 = arith.constant 0 : i32
    %c0_i32_0 = arith.constant 0 : i32
    %c0_i32_1 = arith.constant 0 : i32
    return %c0_i32, %c0_i32_0 : i32, i32
  }
  func.func @transform_2(%arg0: i32, %arg1: memref<8xi32, #tpu.memory_space<smem>>) -> (i32, i32) {
    %c0_i32 = arith.constant 0 : i32
    %c0_i32_0 = arith.constant 0 : i32
    %c0_i32_1 = arith.constant 0 : i32
    return %c0_i32, %c0_i32_0 : i32, i32
  }
  func.func @transform_3(%arg0: i32, %arg1: memref<8xi32, #tpu.memory_space<smem>>) -> (i32, i32) {
    %c0_i32 = arith.constant 0 : i32
    %c0_i32_0 = arith.constant 0 : i32
    %c0_i32_1 = arith.constant 0 : i32
    return %c0_i32, %c0_i32_0 : i32, i32
  }
  func.func @transform_4(%arg0: i32, %arg1: memref<8xi32, #tpu.memory_space<smem>>) -> (i32, i32) {
    %c0_i32 = arith.constant 0 : i32
    %c0_i32_0 = arith.constant 0 : i32
    %c0_i32_1 = arith.constant 0 : i32
    return %c0_i32, %c0_i32_0 : i32, i32
  }
  func.func @transform_5(%arg0: i32, %arg1: memref<8xi32, #tpu.memory_space<smem>>) -> (i32, i32) {
    %c0_i32 = arith.constant 0 : i32
    %c0_i32_0 = arith.constant 0 : i32
    %c0_i32_1 = arith.constant 0 : i32
    return %c0_i32, %c0_i32_0 : i32, i32
  }
  func.func @transform_6(%arg0: i32, %arg1: memref<8xi32, #tpu.memory_space<smem>>) -> (i32, i32) {
    %c0_i32 = arith.constant 0 : i32
    %c0_i32_0 = arith.constant 0 : i32
    %c0_i32_1 = arith.constant 0 : i32
    return %c0_i32, %c0_i32_0 : i32, i32
  }
}

</mosaic_0001>

<llo_original>
// kernel: tpu_custom_call.1
$region0: #{tpu_custom_call.1}
  #allocation0 [shape = 'u32[]', space=smem, size = 0x4, offset = 0x4, fixed_abs, tag = 'smem constant byte address 0x4 - core index']
  #allocation1 [shape = 'u32[72,128]{1,0:T(1,128)}', space=vmem, size = 0x9000, scoped, tag = 'internal scratch']
  #allocation2 [shape = 'f32[8,256]{1,0:T(8,128)}', space=vmem, size = 0x2000, scoped, tag = 'scratch operand']
  #allocation3 [shape = 'f32[8,768]{1,0:T(8,128)}', space=vmem, size = 0x6000, scoped, tag = 'scratch operand']
  #allocation4 [shape = 'f32[1,256]{1,0:T(1,128)}', space=vmem, size = 0x400, scoped, tag = 'scratch operand']
  #allocation5 [shape = 's32[1]{0}', space=sflag, size = 0x4, scoped, tag = 'scoped memory for tpu_custom_call.1']
  #allocation6 [shape = 'u8[512]{0}', space=smem, size = 0x200, scoped, tag = 'prefetched SMEM operand 0']
  %s0 = inlined_call_operand.hbm [shape: s32[8], index: 0, kind: input, shape index: {}]
  %s1 = inlined_call_operand.hbm [shape: f32[64,256], index: 1, kind: input, shape index: {}]
  %s2 = inlined_call_operand.hbm [shape: f32[1,256], index: 2, kind: input, shape index: {}]
  %s3 = inlined_call_operand.hbm [shape: f32[256,768], index: 3, kind: input, shape index: {}]
  %s4 = inlined_call_operand.hbm [shape: f32[256,768], index: 4, kind: input, shape index: {}]
  %s5 = inlined_call_operand.hbm [shape: f32[1,768], index: 5, kind: input, shape index: {}]
  %s6 = inlined_call_operand.hbm [shape: f32[1,768], index: 6, kind: input, shape index: {}]
  %s7 = inlined_call_operand.hbm [shape: f32[8,256], index: 7, kind: output, shape index: {}]
  %s8 = sld [smem:[#allocation0]]
  $region72: #{tpu_custom_call.1} parent=0
    _
  %s10 = ssub.s32 1, %s8
  %s11 = scalar_select 0, %s10, %s8
  %s13 = sshll.u32 %s0, 4
  %s14 = int_to_ptr.hbm [resolvable:$true] %s13
  %16 = dma.hbm_to_smem %s14, 16, [#allocation6], [#allocation5]
  %18 = dma.done [#allocation5], 16
  %19 = sfence
  $region1: #{tpu_custom_call.1} parent=0
    #allocation7 [shape = 'u8[65536]{0}', space=vmem, size = 0x10000, scoped, tag = 'input window, operand 1, single buffered']
    #allocation8 [shape = 's32[1]{0}', space=sflag, size = 0x4, scoped, tag = 'scoped memory for tpu_custom_call.1']
    #allocation9 [shape = 's32[1]{0}', space=sflag, size = 0x4, scoped, tag = 'scoped memory for tpu_custom_call.1']
    #allocation10 [shape = 'u8[1024]{0}', space=vmem, size = 0x400, scoped, tag = 'input window, operand 2, single buffered']
    #allocation11 [shape = 's32[1]{0}', space=sflag, size = 0x4, scoped, tag = 'scoped memory for tpu_custom_call.1']
    #allocation12 [shape = 'u8[786432]{0}', space=vmem, size = 0xc0000, scoped, tag = 'input window, operand 3, single buffered']
    #allocation13 [shape = 'u8[786432]{0}', space=vmem, size = 0xc0000, scoped, tag = 'input window, operand 4, single buffered']
    #allocation14 [shape = 's32[1]{0}', space=sflag, size = 0x4, scoped, tag = 'scoped memory for tpu_custom_call.1']
    #allocation15 [shape = 'u8[3072]{0}', space=vmem, size = 0xc00, scoped, tag = 'input window, operand 5, single buffered']
    #allocation16 [shape = 'u8[3072]{0}', space=vmem, size = 0xc00, scoped, tag = 'input window, operand 6, single buffered']
    #allocation17 [shape = 's32[1]{0}', space=sflag, size = 0x4, scoped, tag = 'scoped memory for tpu_custom_call.1']
    #allocation18 [shape = 'u8[8192]{0}', space=vmem, size = 0x2000, scoped, tag = 'output window, operand 0, single buffered']
    %20 = vsyncpa [#allocation8], 0
    %21 = vsyncpa [#allocation11], 0
    %22 = vsyncpa [#allocation14], 0
    %23 = vsyncpa [#allocation17], 0
    %24 = vsyncpa [#allocation9], 0
    // Predicated region
    $region2: #{tpu_custom_call.1} parent=1 // pred_check
      _
    $region3: #{tpu_custom_call.1} parent=1 // pred_check_branch
      %26 = sbr.rel (0) target = $region5
    $region4: #{tpu_custom_call.1} parent=1 // pred_region
      %28 = vsyncadd [#allocation8], 0
      %s29 = sshll.u32 %s1, 4
      %s30 = int_to_ptr.hbm [resolvable:$true] %s29
      %s31 = sshll.u32 [#allocation7], 4
      %s32 = int_to_ptr.vmem [resolvable:$true] %s31
      %37 = dma.hbm_to_vmem [thread:$0]  %s30, 2048, %s32, [#allocation8], 256, 256, 16
    $region5: #{tpu_custom_call.1} parent=1 // pred_fallthru
      _
    // Predicated region
    $region6: #{tpu_custom_call.1} parent=1 // pred_check
      _
    $region7: #{tpu_custom_call.1} parent=1 // pred_check_branch
      %39 = sbr.rel (0) target = $region9
    $region8: #{tpu_custom_call.1} parent=1 // pred_region
      %41 = vsyncadd [#allocation11], 0
      %s43 = sshll.u32 %s2, 4
      %s44 = int_to_ptr.hbm [resolvable:$true] %s43
      %s45 = sshll.u32 [#allocation10], 4
      %s46 = int_to_ptr.vmem [resolvable:$true] %s45
      %48 = dma.hbm_to_vmem [thread:$0]  %s44, 32, %s46, [#allocation11]
    $region9: #{tpu_custom_call.1} parent=1 // pred_fallthru
      _
    // Predicated region
    $region10: #{tpu_custom_call.1} parent=1 // pred_check
      _
    $region11: #{tpu_custom_call.1} parent=1 // pred_check_branch
      %50 = sbr.rel (0) target = $region13
    $region12: #{tpu_custom_call.1} parent=1 // pred_region
      %52 = vsyncadd [#allocation11], 0
      %s53 = sshll.u32 %s3, 4
      %s54 = int_to_ptr.hbm [resolvable:$true] %s53
      %s55 = sshll.u32 [#allocation12], 4
      %s56 = int_to_ptr.vmem [resolvable:$true] %s55
      %61 = dma.hbm_to_vmem [thread:$0]  %s54, 24576, %s56, [#allocation11], 768, 768, 48
    $region13: #{tpu_custom_call.1} parent=1 // pred_fallthru
      _
    // Predicated region
    $region14: #{tpu_custom_call.1} parent=1 // pred_check
      _
    $region15: #{tpu_custom_call.1} parent=1 // pred_check_branch
      %63 = sbr.rel (0) target = $region17
    $region16: #{tpu_custom_call.1} parent=1 // pred_region
      %65 = vsyncadd [#allocation14], 0
      %s66 = sshll.u32 %s4, 4
      %s67 = int_to_ptr.hbm [resolvable:$true] %s66
      %s68 = sshll.u32 [#allocation13], 4
      %s69 = int_to_ptr.vmem [resolvable:$true] %s68
      %74 = dma.hbm_to_vmem [thread:$0]  %s67, 24576, %s69, [#allocation14], 768, 768, 48
    $region17: #{tpu_custom_call.1} parent=1 // pred_fallthru
      _
    // Predicated region
    $region18: #{tpu_custom_call.1} parent=1 // pred_check
      _
    $region19: #{tpu_custom_call.1} parent=1 // pred_check_branch
      %76 = sbr.rel (0) target = $region21
    $region20: #{tpu_custom_call.1} parent=1 // pred_region
      %78 = vsyncadd [#allocation14], 0
      %s80 = sshll.u32 %s5, 4
      %s81 = int_to_ptr.hbm [resolvable:$true] %s80
      %s82 = sshll.u32 [#allocation15], 4
      %s83 = int_to_ptr.vmem [resolvable:$true] %s82
      %85 = dma.hbm_to_vmem [thread:$0]  %s81, 96, %s83, [#allocation14]
    $region21: #{tpu_custom_call.1} parent=1 // pred_fallthru
      _
    // Predicated region
    $region22: #{tpu_custom_call.1} parent=1 // pred_check
      _
    $region23: #{tpu_custom_call.1} parent=1 // pred_check_branch
      %87 = sbr.rel (0) target = $region25
    $region24: #{tpu_custom_call.1} parent=1 // pred_region
      %89 = vsyncadd [#allocation17], 0
      %s91 = sshll.u32 %s6, 4
      %s92 = int_to_ptr.hbm [resolvable:$true] %s91
      %s93 = sshll.u32 [#allocation16], 4
      %s94 = int_to_ptr.vmem [resolvable:$true] %s93
      %96 = dma.hbm_to_vmem [thread:$0]  %s92, 96, %s94, [#allocation17]
    $region25: #{tpu_custom_call.1} parent=1 // pred_fallthru
      _
    // Predicated region
    $region26: #{tpu_custom_call.1} parent=1 // pred_check
      _
    $region27: #{tpu_custom_call.1} parent=1 // pred_check_branch
      %98 = sbr.rel (0) target = $region29
    $region28: #{tpu_custom_call.1} parent=1 // pred_region
      %100 = dma.done [#allocation8], 2048
    $region29: #{tpu_custom_call.1} parent=1 // pred_fallthru
      _
    // Predicated region
    $region30: #{tpu_custom_call.1} parent=1 // pred_check
      _
    $region31: #{tpu_custom_call.1} parent=1 // pred_check_branch
      %102 = sbr.rel (0) target = $region33
    $region32: #{tpu_custom_call.1} parent=1 // pred_region
      %104 = dma.done [#allocation11], 32
    $region33: #{tpu_custom_call.1} parent=1 // pred_fallthru
      _
    // Predicated region
    $region34: #{tpu_custom_call.1} parent=1 // pred_check
      _
    $region35: #{tpu_custom_call.1} parent=1 // pred_check_branch
      %106 = sbr.rel (0) target = $region37
    $region36: #{tpu_custom_call.1} parent=1 // pred_region
      %108 = dma.done [#allocation11], 24576
    $region37: #{tpu_custom_call.1} parent=1 // pred_fallthru
      _
    // Predicated region
    $region38: #{tpu_custom_call.1} parent=1 // pred_check
      _
    $region39: #{tpu_custom_call.1} parent=1 // pred_check_branch
      %110 = sbr.rel (0) target = $region41
    $region40: #{tpu_custom_call.1} parent=1 // pred_region
      %112 = dma.done [#allocation14], 24576
    $region41: #{tpu_custom_call.1} parent=1 // pred_fallthru
      _
    // Predicated region
    $region42: #{tpu_custom_call.1} parent=1 // pred_check
      _
    $region43: #{tpu_custom_call.1} parent=1 // pred_check_branch
      %114 = sbr.rel (0) target = $region45
    $region44: #{tpu_custom_call.1} parent=1 // pred_region
      %116 = dma.done [#allocation14], 96
    $region45: #{tpu_custom_call.1} parent=1 // pred_fallthru
      _
    // Predicated region
    $region46: #{tpu_custom_call.1} parent=1 // pred_check
      _
    $region47: #{tpu_custom_call.1} parent=1 // pred_check_branch
      %118 = sbr.rel (0) target = $region49
    $region48: #{tpu_custom_call.1} parent=1 // pred_region
      %120 = dma.done [#allocation17], 96
    $region49: #{tpu_custom_call.1} parent=1 // pred_fallthru
      _
    loop: start=0, step=1, limit=8
    $region50: #{tpu_custom_call.1} parent=1 // loop_pre_header
      _
    $region51: #{tpu_custom_call.1} parent=1 // loop_header
      %s122 = sphi 0, %s126
      %p123 = scmp.ge.s32.totalorder %s122, 8
    $region52: #{tpu_custom_call.1} parent=1 // loop_header_branch
      %125 = sbr.rel (%p123) target = $region56
    $region53: #{tpu_custom_call.1} parent=1 // loop_body
      %s127 = sld [smem:[#allocation6 + %s122]]
      %s128 = sshra.s32 %s127, 3
      %s129 = sand.u32 %s127, 7
      %s130 = sshra.s32 %s127, 3
      %s131 = sand.u32 %s127, 7
      %s132 = smul.u32 %s128, 2
      %s133 = smul.u32 %s132, 8
      %s134 = sadd.s32 %s133, %s131
      %s135 = scalar_lea.vmem [#allocation7], %s134
      %v136 = vld [vmem:[%s135] ss:$8 sm:$0x3]
      %v137 = vlaneseq
      %vm138 = vcmp.ge.s32.totalorder %v137, 0
      %vm139 = vcmp.lt.s32.totalorder %v137, 256
      %vm140 = vmand %vm138, %vm139
      %s141 = sshra.s32 %s122, 3
      %s142 = sand.u32 %s122, 7
      %s143 = sshra.s32 %s122, 3
      %s144 = sand.u32 %s122, 7
      %s145 = smul.u32 %s141, 2
      %s146 = smul.u32 %s145, 8
      %s147 = sadd.s32 %s146, %s144
      %s148 = scalar_lea.vmem [#allocation2], %s147
      %149 = vst.msk [vmem:[%s148] ss:$8 sm:$0x3] %vm140, %v136
      %150 = vst.msk [vmem:[%s148] ss:$8 sm:$0x0] %vm140, %v136
    $region54: #{tpu_custom_call.1} parent=1 // loop_footer
      %s126 = sadd.s32 1, %s122
    $region55: #{tpu_custom_call.1} parent=1 // loop_footer_branch
      %121 = sbr.rel target = $region51
    $region56: #{tpu_custom_call.1} parent=1 // loop_exit
      _
    %v151 = vld [vmem:[#allocation2] sm:$0xff]
    %v152 = vld [vmem:[#allocation2 + $0x8] sm:$0xff]
    %v153 = vld [vmem:[#allocation12] sm:$0xff]
    %v154 = vld [vmem:[#allocation12 + $0x8] sm:$0xff]
    %v155 = vld [vmem:[#allocation12 + $0x10] sm:$0xff]
    %v156 = vld [vmem:[#allocation12 + $0x18] sm:$0xff]
    %v157 = vld [vmem:[#allocation12 + $0x20] sm:$0xff]
    %v158 = vld [vmem:[#allocation12 + $0x28] sm:$0xff]
    %v159 = vld [vmem:[#allocation12 + $0x30] sm:$0xff]
    %v160 = vld [vmem:[#allocation12 + $0x38] sm:$0xff]
    %v161 = vld [vmem:[#allocation12 + $0x40] sm:$0xff]
    %v162 = vld [vmem:[#allocation12 + $0x48] sm:$0xff]
    %v163 = vld [vmem:[#allocation12 + $0x50] sm:$0xff]
    %v164 = vld [vmem:[#allocation12 + $0x58] sm:$0xff]
    %v165 = vld [vmem:[#allocation12 + $0x60] sm:$0xff]
    %v166 = vld [vmem:[#allocation12 + $0x68] sm:$0xff]
    %v167 = vld [vmem:[#allocation12 + $0x70] sm:$0xff]
    %v168 = vld [vmem:[#allocation12 + $0x78] sm:$0xff]
    %v169 = vld [vmem:[#allocation12 + $0x80] sm:$0xff]
    %v170 = vld [vmem:[#allocation12 + $0x88] sm:$0xff]
    %v171 = vld [vmem:[#allocation12 + $0x90] sm:$0xff]
    %v172 = vld [vmem:[#allocation12 + $0x98] sm:$0xff]
    %v173 = vld [vmem:[#allocation12 + $0xa0] sm:$0xff]
    %v174 = vld [vmem:[#allocation12 + $0xa8] sm:$0xff]
    %v175 = vld [vmem:[#allocation12 + $0xb0] sm:$0xff]
    %v176 = vld [vmem:[#allocation12 + $0xb8] sm:$0xff]
    %v177 = vld [vmem:[#allocation12 + $0xc0] sm:$0xff]
    %v178 = vld [vmem:[#allocation12 + $0xc8] sm:$0xff]
    %v179 = vld [vmem:[#allocation12 + $0xd0] sm:$0xff]
    %v180 = vld [vmem:[#allocation12 + $0xd8] sm:$0xff]
    %v181 = vld [vmem:[#allocation12 + $0xe0] sm:$0xff]
    %v182 = vld [vmem:[#allocation12 + $0xe8] sm:$0xff]
    %v183 = vld [vmem:[#allocation12 + $0xf0] sm:$0xff]
    %v184 = vld [vmem:[#allocation12 + $0xf8] sm:$0xff]
    %v185 = vld [vmem:[#allocation12 + $0x100] sm:$0xff]
    %v186 = vld [vmem:[#allocation12 + $0x108] sm:$0xff]
    %v187 = vld [vmem:[#allocation12 + $0x110] sm:$0xff]
    %v188 = vld [vmem:[#allocation12 + $0x118] sm:$0xff]
    %v189 = vld [vmem:[#allocation12 + $0x120] sm:$0xff]
    %v190 = vld [vmem:[#allocation12 + $0x128] sm:$0xff]
    %v191 = vld [vmem:[#allocation12 + $0x130] sm:$0xff]
    %v192 = vld [vmem:[#allocation12 + $0x138] sm:$0xff]
    %v193 = vld [vmem:[#allocation12 + $0x140] sm:$0xff]
    %v194 = vld [vmem:[#allocation12 + $0x148] sm:$0xff]
    %v195 = vld [vmem:[#allocation12 + $0x150] sm:$0xff]
    %v196 = vld [vmem:[#allocation12 + $0x158] sm:$0xff]
    %v197 = vld [vmem:[#allocation12 + $0x160] sm:$0xff]
    %v198 = vld [vmem:[#allocation12 + $0x168] sm:$0xff]
    %v199 = vld [vmem:[#allocation12 + $0x170] sm:$0xff]
    %v200 = vld [vmem:[#allocation12 + $0x178] sm:$0xff]
    %v201 = vld [vmem:[#allocation12 + $0x180] sm:$0xff]
    %v202 = vld [vmem:[#allocation12 + $0x188] sm:$0xff]
    %v203 = vld [vmem:[#allocation12 + $0x190] sm:$0xff]
    %v204 = vld [vmem:[#allocation12 + $0x198] sm:$0xff]
    %v205 = vld [vmem:[#allocation12 + $0x1a0] sm:$0xff]
    %v206 = vld [vmem:[#allocation12 + $0x1a8] sm:$0xff]
    %v207 = vld [vmem:[#allocation12 + $0x1b0] sm:$0xff]
    %v208 = vld [vmem:[#allocation12 + $0x1b8] sm:$0xff]
    %v209 = vld [vmem:[#allocation12 + $0x1c0] sm:$0xff]
    %v210 = vld [vmem:[#allocation12 + $0x1c8] sm:$0xff]
    %v211 = vld [vmem:[#allocation12 + $0x1d0] sm:$0xff]
    %v212 = vld [vmem:[#allocation12 + $0x1d8] sm:$0xff]
    %v213 = vld [vmem:[#allocation12 + $0x1e0] sm:$0xff]
    %v214 = vld [vmem:[#allocation12 + $0x1e8] sm:$0xff]
    %v215 = vld [vmem:[#allocation12 + $0x1f0] sm:$0xff]
    %v216 = vld [vmem:[#allocation12 + $0x1f8] sm:$0xff]
    %v217 = vld [vmem:[#allocation12 + $0x200] sm:$0xff]
    %v218 = vld [vmem:[#allocation12 + $0x208] sm:$0xff]
    %v219 = vld [vmem:[#allocation12 + $0x210] sm:$0xff]
    %v220 = vld [vmem:[#allocation12 + $0x218] sm:$0xff]
    %v221 = vld [vmem:[#allocation12 + $0x220] sm:$0xff]
    %v222 = vld [vmem:[#allocation12 + $0x228] sm:$0xff]
    %v223 = vld [vmem:[#allocation12 + $0x230] sm:$0xff]
    %v224 = vld [vmem:[#allocation12 + $0x238] sm:$0xff]
    %v225 = vld [vmem:[#allocation12 + $0x240] sm:$0xff]
    %v226 = vld [vmem:[#allocation12 + $0x248] sm:$0xff]
    %v227 = vld [vmem:[#allocation12 + $0x250] sm:$0xff]
    %v228 = vld [vmem:[#allocation12 + $0x258] sm:$0xff]
    %v229 = vld [vmem:[#allocation12 + $0x260] sm:$0xff]
    %v230 = vld [vmem:[#allocation12 + $0x268] sm:$0xff]
    %v231 = vld [vmem:[#allocation12 + $0x270] sm:$0xff]
    %v232 = vld [vmem:[#allocation12 + $0x278] sm:$0xff]
    %v233 = vld [vmem:[#allocation12 + $0x280] sm:$0xff]
    %v234 = vld [vmem:[#allocation12 + $0x288] sm:$0xff]
    %v235 = vld [vmem:[#allocation12 + $0x290] sm:$0xff]
    %v236 = vld [vmem:[#allocation12 + $0x298] sm:$0xff]
    %v237 = vld [vmem:[#allocation12 + $0x2a0] sm:$0xff]
    %v238 = vld [vmem:[#allocation12 + $0x2a8] sm:$0xff]
    %v239 = vld [vmem:[#allocation12 + $0x2b0] sm:$0xff]
    %v240 = vld [vmem:[#allocation12 + $0x2b8] sm:$0xff]
    %v241 = vld [vmem:[#allocation12 + $0x2c0] sm:$0xff]
    %v242 = vld [vmem:[#allocation12 + $0x2c8] sm:$0xff]
    %v243 = vld [vmem:[#allocation12 + $0x2d0] sm:$0xff]
    %v244 = vld [vmem:[#allocation12 + $0x2d8] sm:$0xff]
    %v245 = vld [vmem:[#allocation12 + $0x2e0] sm:$0xff]
    %v246 = vld [vmem:[#allocation12 + $0x2e8] sm:$0xff]
    %v247 = vld [vmem:[#allocation12 + $0x2f0] sm:$0xff]
    %v248 = vld [vmem:[#allocation12 + $0x2f8] sm:$0xff]
    %v249 = vld [vmem:[#allocation12 + $0x300] sm:$0xff]
    %v250 = vld [vmem:[#allocation12 + $0x308] sm:$0xff]
    %v251 = vld [vmem:[#allocation12 + $0x310] sm:$0xff]
    %v252 = vld [vmem:[#allocation12 + $0x318] sm:$0xff]
    %v253 = vld [vmem:[#allocation12 + $0x320] sm:$0xff]
    %v254 = vld [vmem:[#allocation12 + $0x328] sm:$0xff]
    %v255 = vld [vmem:[#allocation12 + $0x330] sm:$0xff]
    %v256 = vld [vmem:[#allocation12 + $0x338] sm:$0xff]
    %v257 = vld [vmem:[#allocation12 + $0x340] sm:$0xff]
    %v258 = vld [vmem:[#allocation12 + $0x348] sm:$0xff]
    %v259 = vld [vmem:[#allocation12 + $0x350] sm:$0xff]
    %v260 = vld [vmem:[#allocation12 + $0x358] sm:$0xff]
    %v261 = vld [vmem:[#allocation12 + $0x360] sm:$0xff]
    %v262 = vld [vmem:[#allocation12 + $0x368] sm:$0xff]
    %v263 = vld [vmem:[#allocation12 + $0x370] sm:$0xff]
    %v264 = vld [vmem:[#allocation12 + $0x378] sm:$0xff]
    %v265 = vld [vmem:[#allocation12 + $0x380] sm:$0xff]
    %v266 = vld [vmem:[#allocation12 + $0x388] sm:$0xff]
    %v267 = vld [vmem:[#allocation12 + $0x390] sm:$0xff]
    %v268 = vld [vmem:[#allocation12 + $0x398] sm:$0xff]
    %v269 = vld [vmem:[#allocation12 + $0x3a0] sm:$0xff]
    %v270 = vld [vmem:[#allocation12 + $0x3a8] sm:$0xff]
    %v271 = vld [vmem:[#allocation12 + $0x3b0] sm:$0xff]
    %v272 = vld [vmem:[#allocation12 + $0x3b8] sm:$0xff]
    %v273 = vld [vmem:[#allocation12 + $0x3c0] sm:$0xff]
    %v274 = vld [vmem:[#allocation12 + $0x3c8] sm:$0xff]
    %v275 = vld [vmem:[#allocation12 + $0x3d0] sm:$0xff]
    %v276 = vld [vmem:[#allocation12 + $0x3d8] sm:$0xff]
    %v277 = vld [vmem:[#allocation12 + $0x3e0] sm:$0xff]
    %v278 = vld [vmem:[#allocation12 + $0x3e8] sm:$0xff]
    %v279 = vld [vmem:[#allocation12 + $0x3f0] sm:$0xff]
    %v280 = vld [vmem:[#allocation12 + $0x3f8] sm:$0xff]
    %v281 = vld [vmem:[#allocation12 + $0x400] sm:$0xff]
    %v282 = vld [vmem:[#allocation12 + $0x408] sm:$0xff]
    %v283 = vld [vmem:[#allocation12 + $0x410] sm:$0xff]
    %v284 = vld [vmem:[#allocation12 + $0x418] sm:$0xff]
    %v285 = vld [vmem:[#allocation12 + $0x420] sm:$0xff]
    %v286 = vld [vmem:[#allocation12 + $0x428] sm:$0xff]
    %v287 = vld [vmem:[#allocation12 + $0x430] sm:$0xff]
    %v288 = vld [vmem:[#allocation12 + $0x438] sm:$0xff]
    %v289 = vld [vmem:[#allocation12 + $0x440] sm:$0xff]
    %v290 = vld [vmem:[#allocation12 + $0x448] sm:$0xff]
    %v291 = vld [vmem:[#allocation12 + $0x450] sm:$0xff]
    %v292 = vld [vmem:[#allocation12 + $0x458] sm:$0xff]
    %v293 = vld [vmem:[#allocation12 + $0x460] sm:$0xff]
    %v294 = vld [vmem:[#allocation12 + $0x468] sm:$0xff]
    %v295 = vld [vmem:[#allocation12 + $0x470] sm:$0xff]
    %v296 = vld [vmem:[#allocation12 + $0x478] sm:$0xff]
    %v297 = vld [vmem:[#allocation12 + $0x480] sm:$0xff]
    %v298 = vld [vmem:[#allocation12 + $0x488] sm:$0xff]
    %v299 = vld [vmem:[#allocation12 + $0x490] sm:$0xff]
    %v300 = vld [vmem:[#allocation12 + $0x498] sm:$0xff]
    %v301 = vld [vmem:[#allocation12 + $0x4a0] sm:$0xff]
    %v302 = vld [vmem:[#allocation12 + $0x4a8] sm:$0xff]
    %v303 = vld [vmem:[#allocation12 + $0x4b0] sm:$0xff]
    %v304 = vld [vmem:[#allocation12 + $0x4b8] sm:$0xff]
    %v305 = vld [vmem:[#allocation12 + $0x4c0] sm:$0xff]
    %v306 = vld [vmem:[#allocation12 + $0x4c8] sm:$0xff]
    %v307 = vld [vmem:[#allocation12 + $0x4d0] sm:$0xff]
    %v308 = vld [vmem:[#allocation12 + $0x4d8] sm:$0xff]
    %v309 = vld [vmem:[#allocation12 + $0x4e0] sm:$0xff]
    %v310 = vld [vmem:[#allocation12 + $0x4e8] sm:$0xff]
    %v311 = vld [vmem:[#allocation12 + $0x4f0] sm:$0xff]
    %v312 = vld [vmem:[#allocation12 + $0x4f8] sm:$0xff]
    %v313 = vld [vmem:[#allocation12 + $0x500] sm:$0xff]
    %v314 = vld [vmem:[#allocation12 + $0x508] sm:$0xff]
    %v315 = vld [vmem:[#allocation12 + $0x510] sm:$0xff]
    %v316 = vld [vmem:[#allocation12 + $0x518] sm:$0xff]
    %v317 = vld [vmem:[#allocation12 + $0x520] sm:$0xff]
    %v318 = vld [vmem:[#allocation12 + $0x528] sm:$0xff]
    %v319 = vld [vmem:[#allocation12 + $0x530] sm:$0xff]
    %v320 = vld [vmem:[#allocation12 + $0x538] sm:$0xff]
    %v321 = vld [vmem:[#allocation12 + $0x540] sm:$0xff]
    %v322 = vld [vmem:[#allocation12 + $0x548] sm:$0xff]
    %v323 = vld [vmem:[#allocation12 + $0x550] sm:$0xff]
    %v324 = vld [vmem:[#allocation12 + $0x558] sm:$0xff]
    %v325 = vld [vmem:[#allocation12 + $0x560] sm:$0xff]
    %v326 = vld [vmem:[#allocation12 + $0x568] sm:$0xff]
    %v327 = vld [vmem:[#allocation12 + $0x570] sm:$0xff]
    %v328 = vld [vmem:[#allocation12 + $0x578] sm:$0xff]
    %v329 = vld [vmem:[#allocation12 + $0x580] sm:$0xff]
    %v330 = vld [vmem:[#allocation12 + $0x588] sm:$0xff]
    %v331 = vld [vmem:[#allocation12 + $0x590] sm:$0xff]
    %v332 = vld [vmem:[#allocation12 + $0x598] sm:$0xff]
    %v333 = vld [vmem:[#allocation12 + $0x5a0] sm:$0xff]
    %v334 = vld [vmem:[#allocation12 + $0x5a8] sm:$0xff]
    %v335 = vld [vmem:[#allocation12 + $0x5b0] sm:$0xff]
    %v336 = vld [vmem:[#allocation12 + $0x5b8] sm:$0xff]
    %v337 = vld [vmem:[#allocation12 + $0x5c0] sm:$0xff]
    %v338 = vld [vmem:[#allocation12 + $0x5c8] sm:$0xff]
    %v339 = vld [vmem:[#allocation12 + $0x5d0] sm:$0xff]
    %v340 = vld [vmem:[#allocation12 + $0x5d8] sm:$0xff]
    %v341 = vld [vmem:[#allocation12 + $0x5e0] sm:$0xff]
    %v342 = vld [vmem:[#allocation12 + $0x5e8] sm:$0xff]
    %v343 = vld [vmem:[#allocation12 + $0x5f0] sm:$0xff]
    %v344 = vld [vmem:[#allocation12 + $0x5f8] sm:$0xff]
    %v345 = vld [vmem:[#allocation15] sm:$0x3f]
    %v347 = vperm.slane %v345, 0
    %v348 = vperm.slane %v345, 1
    %v349 = vperm.slane %v345, 2
    %v350 = vperm.slane %v345, 3
    %v351 = vperm.slane %v345, 4
    %v352 = vperm.slane %v345, 5
    %359 = vmatpush.msra.mxu0 %v243
    %360 = vmatpush.msra.mxu0 %v237
    %361 = vmatpush.msra.mxu0 %v231
    %362 = vmatpush.msra.mxu0 %v225
    %363 = vmatpush.msra.mxu0 %v219
    %364 = vmatpush.msra.mxu0 %v213
    %365 = vmatpush.msra.mxu0 %v207
    %366 = vmatpush.msra.mxu0 %v201
    %367 = vmatpush.msra.mxu0 %v195
    %368 = vmatpush.msra.mxu0 %v189
    %369 = vmatpush.msra.mxu0 %v183
    %370 = vmatpush.msra.mxu0 %v177
    %371 = vmatpush.msra.mxu0 %v171
    %372 = vmatpush.msra.mxu0 %v165
    %373 = vmatpush.msra.mxu0 %v159
    %374 = vmatpush.msra.mxu0 %v153
    %375 = vmatmul.f32.gmra.mxu0 %v151
    %v376 = vpop.f32.mrf.mxu0
    %v377 = vadd.f32 %v347, %v376
    %378 = vdwg.mxu0
    %379 = vmatpush.msra.mxu0 %v339
    %380 = vmatpush.msra.mxu0 %v333
    %381 = vmatpush.msra.mxu0 %v327
    %382 = vmatpush.msra.mxu0 %v321
    %383 = vmatpush.msra.mxu0 %v315
    %384 = vmatpush.msra.mxu0 %v309
    %385 = vmatpush.msra.mxu0 %v303
    %386 = vmatpush.msra.mxu0 %v297
    %387 = vmatpush.msra.mxu0 %v291
    %388 = vmatpush.msra.mxu0 %v285
    %389 = vmatpush.msra.mxu0 %v279
    %390 = vmatpush.msra.mxu0 %v273
    %391 = vmatpush.msra.mxu0 %v267
    %392 = vmatpush.msra.mxu0 %v261
    %393 = vmatpush.msra.mxu0 %v255
    %394 = vmatpush.msra.mxu0 %v249
    %395 = vmatmul.f32.gmra.mxu0 %v152
    %v396 = vpop.f32.mrf.mxu0
    %v397 = vadd.f32 %v377, %v396
    %398 = vdwg.mxu0
    %399 = vmatpush.msra.mxu0 %v244
    %400 = vmatpush.msra.mxu0 %v238
    %401 = vmatpush.msra.mxu0 %v232
    %402 = vmatpush.msra.mxu0 %v226
    %403 = vmatpush.msra.mxu0 %v220
    %404 = vmatpush.msra.mxu0 %v214
    %405 = vmatpush.msra.mxu0 %v208
    %406 = vmatpush.msra.mxu0 %v202
    %407 = vmatpush.msra.mxu0 %v196
    %408 = vmatpush.msra.mxu0 %v190
    %409 = vmatpush.msra.mxu0 %v184
    %410 = vmatpush.msra.mxu0 %v178
    %411 = vmatpush.msra.mxu0 %v172
    %412 = vmatpush.msra.mxu0 %v166
    %413 = vmatpush.msra.mxu0 %v160
    %414 = vmatpush.msra.mxu0 %v154
    %415 = vmatmul.f32.gmra.mxu0 %v151
    %v416 = vpop.f32.mrf.mxu0
    %v417 = vadd.f32 %v348, %v416
    %418 = vdwg.mxu0
    %419 = vmatpush.msra.mxu0 %v340
    %420 = vmatpush.msra.mxu0 %v334
    %421 = vmatpush.msra.mxu0 %v328
    %422 = vmatpush.msra.mxu0 %v322
    %423 = vmatpush.msra.mxu0 %v316
    %424 = vmatpush.msra.mxu0 %v310
    %425 = vmatpush.msra.mxu0 %v304
    %426 = vmatpush.msra.mxu0 %v298
    %427 = vmatpush.msra.mxu0 %v292
    %428 = vmatpush.msra.mxu0 %v286
    %429 = vmatpush.msra.mxu0 %v280
    %430 = vmatpush.msra.mxu0 %v274
    %431 = vmatpush.msra.mxu0 %v268
    %432 = vmatpush.msra.mxu0 %v262
    %433 = vmatpush.msra.mxu0 %v256
    %434 = vmatpush.msra.mxu0 %v250
    %435 = vmatmul.f32.gmra.mxu0 %v152
    %v436 = vpop.f32.mrf.mxu0
    %v437 = vadd.f32 %v417, %v436
    %438 = vdwg.mxu0
    %439 = vmatpush.msra.mxu0 %v245
    %440 = vmatpush.msra.mxu0 %v239
    %441 = vmatpush.msra.mxu0 %v233
    %442 = vmatpush.msra.mxu0 %v227
    %443 = vmatpush.msra.mxu0 %v221
    %444 = vmatpush.msra.mxu0 %v215
    %445 = vmatpush.msra.mxu0 %v209
    %446 = vmatpush.msra.mxu0 %v203
    %447 = vmatpush.msra.mxu0 %v197
    %448 = vmatpush.msra.mxu0 %v191
    %449 = vmatpush.msra.mxu0 %v185
    %450 = vmatpush.msra.mxu0 %v179
    %451 = vmatpush.msra.mxu0 %v173
    %452 = vmatpush.msra.mxu0 %v167
    %453 = vmatpush.msra.mxu0 %v161
    %454 = vmatpush.msra.mxu0 %v155
    %455 = vmatmul.f32.gmra.mxu0 %v151
    %v456 = vpop.f32.mrf.mxu0
    %v457 = vadd.f32 %v349, %v456
    %458 = vdwg.mxu0
    %459 = vmatpush.msra.mxu0 %v341
    %460 = vmatpush.msra.mxu0 %v335
    %461 = vmatpush.msra.mxu0 %v329
    %462 = vmatpush.msra.mxu0 %v323
    %463 = vmatpush.msra.mxu0 %v317
    %464 = vmatpush.msra.mxu0 %v311
    %465 = vmatpush.msra.mxu0 %v305
    %466 = vmatpush.msra.mxu0 %v299
    %467 = vmatpush.msra.mxu0 %v293
    %468 = vmatpush.msra.mxu0 %v287
    %469 = vmatpush.msra.mxu0 %v281
    %470 = vmatpush.msra.mxu0 %v275
    %471 = vmatpush.msra.mxu0 %v269
    %472 = vmatpush.msra.mxu0 %v263
    %473 = vmatpush.msra.mxu0 %v257
    %474 = vmatpush.msra.mxu0 %v251
    %475 = vmatmul.f32.gmra.mxu0 %v152
    %v476 = vpop.f32.mrf.mxu0
    %v477 = vadd.f32 %v457, %v476
    %478 = vdwg.mxu0
    %479 = vmatpush.msra.mxu0 %v246
    %480 = vmatpush.msra.mxu0 %v240
    %481 = vmatpush.msra.mxu0 %v234
    %482 = vmatpush.msra.mxu0 %v228
    %483 = vmatpush.msra.mxu0 %v222
    %484 = vmatpush.msra.mxu0 %v216
    %485 = vmatpush.msra.mxu0 %v210
    %486 = vmatpush.msra.mxu0 %v204
    %487 = vmatpush.msra.mxu0 %v198
    %488 = vmatpush.msra.mxu0 %v192
    %489 = vmatpush.msra.mxu0 %v186
    %490 = vmatpush.msra.mxu0 %v180
    %491 = vmatpush.msra.mxu0 %v174
    %492 = vmatpush.msra.mxu0 %v168
    %493 = vmatpush.msra.mxu0 %v162
    %494 = vmatpush.msra.mxu0 %v156
    %495 = vmatmul.f32.gmra.mxu0 %v151
    %v496 = vpop.f32.mrf.mxu0
    %v497 = vadd.f32 %v350, %v496
    %498 = vdwg.mxu0
    %499 = vmatpush.msra.mxu0 %v342
    %500 = vmatpush.msra.mxu0 %v336
    %501 = vmatpush.msra.mxu0 %v330
    %502 = vmatpush.msra.mxu0 %v324
    %503 = vmatpush.msra.mxu0 %v318
    %504 = vmatpush.msra.mxu0 %v312
    %505 = vmatpush.msra.mxu0 %v306
    %506 = vmatpush.msra.mxu0 %v300
    %507 = vmatpush.msra.mxu0 %v294
    %508 = vmatpush.msra.mxu0 %v288
    %509 = vmatpush.msra.mxu0 %v282
    %510 = vmatpush.msra.mxu0 %v276
    %511 = vmatpush.msra.mxu0 %v270
    %512 = vmatpush.msra.mxu0 %v264
    %513 = vmatpush.msra.mxu0 %v258
    %514 = vmatpush.msra.mxu0 %v252
    %515 = vmatmul.f32.gmra.mxu0 %v152
    %v516 = vpop.f32.mrf.mxu0
    %v517 = vadd.f32 %v497, %v516
    %518 = vdwg.mxu0
    %519 = vmatpush.msra.mxu0 %v247
    %520 = vmatpush.msra.mxu0 %v241
    %521 = vmatpush.msra.mxu0 %v235
    %522 = vmatpush.msra.mxu0 %v229
    %523 = vmatpush.msra.mxu0 %v223
    %524 = vmatpush.msra.mxu0 %v217
    %525 = vmatpush.msra.mxu0 %v211
    %526 = vmatpush.msra.mxu0 %v205
    %527 = vmatpush.msra.mxu0 %v199
    %528 = vmatpush.msra.mxu0 %v193
    %529 = vmatpush.msra.mxu0 %v187
    %530 = vmatpush.msra.mxu0 %v181
    %531 = vmatpush.msra.mxu0 %v175
    %532 = vmatpush.msra.mxu0 %v169
    %533 = vmatpush.msra.mxu0 %v163
    %534 = vmatpush.msra.mxu0 %v157
    %535 = vmatmul.f32.gmra.mxu0 %v151
    %v536 = vpop.f32.mrf.mxu0
    %v537 = vadd.f32 %v351, %v536
    %538 = vdwg.mxu0
    %539 = vmatpush.msra.mxu0 %v343
    %540 = vmatpush.msra.mxu0 %v337
    %541 = vmatpush.msra.mxu0 %v331
    %542 = vmatpush.msra.mxu0 %v325
    %543 = vmatpush.msra.mxu0 %v319
    %544 = vmatpush.msra.mxu0 %v313
    %545 = vmatpush.msra.mxu0 %v307
    %546 = vmatpush.msra.mxu0 %v301
    %547 = vmatpush.msra.mxu0 %v295
    %548 = vmatpush.msra.mxu0 %v289
    %549 = vmatpush.msra.mxu0 %v283
    %550 = vmatpush.msra.mxu0 %v277
    %551 = vmatpush.msra.mxu0 %v271
    %552 = vmatpush.msra.mxu0 %v265
    %553 = vmatpush.msra.mxu0 %v259
    %554 = vmatpush.msra.mxu0 %v253
    %555 = vmatmul.f32.gmra.mxu0 %v152
    %v556 = vpop.f32.mrf.mxu0
    %v557 = vadd.f32 %v537, %v556
    %558 = vdwg.mxu0
    %559 = vmatpush.msra.mxu0 %v248
    %560 = vmatpush.msra.mxu0 %v242
    %561 = vmatpush.msra.mxu0 %v236
    %562 = vmatpush.msra.mxu0 %v230
    %563 = vmatpush.msra.mxu0 %v224
    %564 = vmatpush.msra.mxu0 %v218
    %565 = vmatpush.msra.mxu0 %v212
    %566 = vmatpush.msra.mxu0 %v206
    %567 = vmatpush.msra.mxu0 %v200
    %568 = vmatpush.msra.mxu0 %v194
    %569 = vmatpush.msra.mxu0 %v188
    %570 = vmatpush.msra.mxu0 %v182
    %571 = vmatpush.msra.mxu0 %v176
    %572 = vmatpush.msra.mxu0 %v170
    %573 = vmatpush.msra.mxu0 %v164
    %574 = vmatpush.msra.mxu0 %v158
    %575 = vmatmul.f32.gmra.mxu0 %v151
    %v576 = vpop.f32.mrf.mxu0
    %v577 = vadd.f32 %v352, %v576
    %578 = vdwg.mxu0
    %579 = vmatpush.msra.mxu0 %v344
    %580 = vmatpush.msra.mxu0 %v338
    %581 = vmatpush.msra.mxu0 %v332
    %582 = vmatpush.msra.mxu0 %v326
    %583 = vmatpush.msra.mxu0 %v320
    %584 = vmatpush.msra.mxu0 %v314
    %585 = vmatpush.msra.mxu0 %v308
    %586 = vmatpush.msra.mxu0 %v302
    %587 = vmatpush.msra.mxu0 %v296
    %588 = vmatpush.msra.mxu0 %v290
    %589 = vmatpush.msra.mxu0 %v284
    %590 = vmatpush.msra.mxu0 %v278
    %591 = vmatpush.msra.mxu0 %v272
    %592 = vmatpush.msra.mxu0 %v266
    %593 = vmatpush.msra.mxu0 %v260
    %594 = vmatpush.msra.mxu0 %v254
    %595 = vmatmul.f32.gmra.mxu0 %v152
    %v596 = vpop.f32.mrf.mxu0
    %v597 = vadd.f32 %v577, %v596
    %598 = vdwg.mxu0
    %599 = vst [vmem:[#allocation3] sm:$0xff] %v397
    %600 = vst [vmem:[#allocation3 + $0x8] sm:$0xff] %v437
    %601 = vst [vmem:[#allocation3 + $0x10] sm:$0xff] %v477
    %602 = vst [vmem:[#allocation3 + $0x18] sm:$0xff] %v517
    %603 = vst [vmem:[#allocation3 + $0x20] sm:$0xff] %v557
    %604 = vst [vmem:[#allocation3 + $0x28] sm:$0xff] %v597
    %v605 = vld [vmem:[#allocation10] sm:$0x3]
    %v606 = vlaneseq
    %vm607 = vcmp.ge.s32.totalorder %v606, 0
    %vm608 = vcmp.lt.s32.totalorder %v606, 256
    %vm609 = vmand %vm607, %vm608
    %610 = vst.msk [vmem:[#allocation4] sm:$0x3] %vm609, %v605
    loop: start=0, step=1, limit=8
    $region57: #{tpu_custom_call.1} parent=1 // loop_pre_header
      _
    $region58: #{tpu_custom_call.1} parent=1 // loop_header
      %s612 = sphi 0, %s616
      %p613 = scmp.ge.s32.totalorder %s612, 8
    $region59: #{tpu_custom_call.1} parent=1 // loop_header_branch
      %615 = sbr.rel (%p613) target = $region63
    $region60: #{tpu_custom_call.1} parent=1 // loop_body
      %v617 = vld [vmem:[#allocation4] sm:$0x3]
      %s618 = sshra.s32 %s612, 3
      %s619 = sand.u32 %s612, 7
      %s620 = sshra.s32 %s612, 3
      %s621 = sand.u32 %s612, 7
      %s622 = smul.u32 %s618, 6
      %s623 = smul.u32 %s622, 8
      %s624 = sadd.s32 %s623, %s621
      %s625 = scalar_lea.vmem [#allocation3], %s624
      %v626 = vld [vmem:[%s625] ss:$8 sm:$0xf]
      %v627 = vld [vmem:[%s625] ss:$8 sm:$0x30]
      %v628 = vor.u32 %v626, %v627
      %v629 = vld [vmem:[#allocation13] sm:$0xff]
      %v630 = vld [vmem:[#allocation13 + $0x8] sm:$0xff]
      %v631 = vld [vmem:[#allocation13 + $0x10] sm:$0xff]
      %v632 = vld [vmem:[#allocation13 + $0x18] sm:$0xff]
      %v633 = vld [vmem:[#allocation13 + $0x20] sm:$0xff]
      %v634 = vld [vmem:[#allocation13 + $0x28] sm:$0xff]
      %v635 = vld [vmem:[#allocation13 + $0x30] sm:$0xff]
      %v636 = vld [vmem:[#allocation13 + $0x38] sm:$0xff]
      %v637 = vld [vmem:[#allocation13 + $0x40] sm:$0xff]
      %v638 = vld [vmem:[#allocation13 + $0x48] sm:$0xff]
      %v639 = vld [vmem:[#allocation13 + $0x50] sm:$0xff]
      %v640 = vld [vmem:[#allocation13 + $0x58] sm:$0xff]
      %v641 = vld [vmem:[#allocation13 + $0x60] sm:$0xff]
      %v642 = vld [vmem:[#allocation13 + $0x68] sm:$0xff]
      %v643 = vld [vmem:[#allocation13 + $0x70] sm:$0xff]
      %v644 = vld [vmem:[#allocation13 + $0x78] sm:$0xff]
      %v645 = vld [vmem:[#allocation13 + $0x80] sm:$0xff]
      %v646 = vld [vmem:[#allocation13 + $0x88] sm:$0xff]
      %v647 = vld [vmem:[#allocation13 + $0x90] sm:$0xff]
      %v648 = vld [vmem:[#allocation13 + $0x98] sm:$0xff]
      %v649 = vld [vmem:[#allocation13 + $0xa0] sm:$0xff]
      %v650 = vld [vmem:[#allocation13 + $0xa8] sm:$0xff]
      %v651 = vld [vmem:[#allocation13 + $0xb0] sm:$0xff]
      %v652 = vld [vmem:[#allocation13 + $0xb8] sm:$0xff]
      %v653 = vld [vmem:[#allocation13 + $0xc0] sm:$0xff]
      %v654 = vld [vmem:[#allocation13 + $0xc8] sm:$0xff]
      %v655 = vld [vmem:[#allocation13 + $0xd0] sm:$0xff]
      %v656 = vld [vmem:[#allocation13 + $0xd8] sm:$0xff]
      %v657 = vld [vmem:[#allocation13 + $0xe0] sm:$0xff]
      %v658 = vld [vmem:[#allocation13 + $0xe8] sm:$0xff]
      %v659 = vld [vmem:[#allocation13 + $0xf0] sm:$0xff]
      %v660 = vld [vmem:[#allocation13 + $0xf8] sm:$0xff]
      %v661 = vld [vmem:[#allocation13 + $0x100] sm:$0xff]
      %v662 = vld [vmem:[#allocation13 + $0x108] sm:$0xff]
      %v663 = vld [vmem:[#allocation13 + $0x110] sm:$0xff]
      %v664 = vld [vmem:[#allocation13 + $0x118] sm:$0xff]
      %v665 = vld [vmem:[#allocation13 + $0x120] sm:$0xff]
      %v666 = vld [vmem:[#allocation13 + $0x128] sm:$0xff]
      %v667 = vld [vmem:[#allocation13 + $0x130] sm:$0xff]
      %v668 = vld [vmem:[#allocation13 + $0x138] sm:$0xff]
      %v669 = vld [vmem:[#allocation13 + $0x140] sm:$0xff]
      %v670 = vld [vmem:[#allocation13 + $0x148] sm:$0xff]
      %v671 = vld [vmem:[#allocation13 + $0x150] sm:$0xff]
      %v672 = vld [vmem:[#allocation13 + $0x158] sm:$0xff]
      %v673 = vld [vmem:[#allocation13 + $0x160] sm:$0xff]
      %v674 = vld [vmem:[#allocation13 + $0x168] sm:$0xff]
      %v675 = vld [vmem:[#allocation13 + $0x170] sm:$0xff]
      %v676 = vld [vmem:[#allocation13 + $0x178] sm:$0xff]
      %v677 = vld [vmem:[#allocation13 + $0x180] sm:$0xff]
      %v678 = vld [vmem:[#allocation13 + $0x188] sm:$0xff]
      %v679 = vld [vmem:[#allocation13 + $0x190] sm:$0xff]
      %v680 = vld [vmem:[#allocation13 + $0x198] sm:$0xff]
      %v681 = vld [vmem:[#allocation13 + $0x1a0] sm:$0xff]
      %v682 = vld [vmem:[#allocation13 + $0x1a8] sm:$0xff]
      %v683 = vld [vmem:[#allocation13 + $0x1b0] sm:$0xff]
      %v684 = vld [vmem:[#allocation13 + $0x1b8] sm:$0xff]
      %v685 = vld [vmem:[#allocation13 + $0x1c0] sm:$0xff]
      %v686 = vld [vmem:[#allocation13 + $0x1c8] sm:$0xff]
      %v687 = vld [vmem:[#allocation13 + $0x1d0] sm:$0xff]
      %v688 = vld [vmem:[#allocation13 + $0x1d8] sm:$0xff]
      %v689 = vld [vmem:[#allocation13 + $0x1e0] sm:$0xff]
      %v690 = vld [vmem:[#allocation13 + $0x1e8] sm:$0xff]
      %v691 = vld [vmem:[#allocation13 + $0x1f0] sm:$0xff]
      %v692 = vld [vmem:[#allocation13 + $0x1f8] sm:$0xff]
      %v693 = vld [vmem:[#allocation13 + $0x200] sm:$0xff]
      %v694 = vld [vmem:[#allocation13 + $0x208] sm:$0xff]
      %v695 = vld [vmem:[#allocation13 + $0x210] sm:$0xff]
      %v696 = vld [vmem:[#allocation13 + $0x218] sm:$0xff]
      %v697 = vld [vmem:[#allocation13 + $0x220] sm:$0xff]
      %v698 = vld [vmem:[#allocation13 + $0x228] sm:$0xff]
      %v699 = vld [vmem:[#allocation13 + $0x230] sm:$0xff]
      %v700 = vld [vmem:[#allocation13 + $0x238] sm:$0xff]
      %v701 = vld [vmem:[#allocation13 + $0x240] sm:$0xff]
      %v702 = vld [vmem:[#allocation13 + $0x248] sm:$0xff]
      %v703 = vld [vmem:[#allocation13 + $0x250] sm:$0xff]
      %v704 = vld [vmem:[#allocation13 + $0x258] sm:$0xff]
      %v705 = vld [vmem:[#allocation13 + $0x260] sm:$0xff]
      %v706 = vld [vmem:[#allocation13 + $0x268] sm:$0xff]
      %v707 = vld [vmem:[#allocation13 + $0x270] sm:$0xff]
      %v708 = vld [vmem:[#allocation13 + $0x278] sm:$0xff]
      %v709 = vld [vmem:[#allocation13 + $0x280] sm:$0xff]
      %v710 = vld [vmem:[#allocation13 + $0x288] sm:$0xff]
      %v711 = vld [vmem:[#allocation13 + $0x290] sm:$0xff]
      %v712 = vld [vmem:[#allocation13 + $0x298] sm:$0xff]
      %v713 = vld [vmem:[#allocation13 + $0x2a0] sm:$0xff]
      %v714 = vld [vmem:[#allocation13 + $0x2a8] sm:$0xff]
      %v715 = vld [vmem:[#allocation13 + $0x2b0] sm:$0xff]
      %v716 = vld [vmem:[#allocation13 + $0x2b8] sm:$0xff]
      %v717 = vld [vmem:[#allocation13 + $0x2c0] sm:$0xff]
      %v718 = vld [vmem:[#allocation13 + $0x2c8] sm:$0xff]
      %v719 = vld [vmem:[#allocation13 + $0x2d0] sm:$0xff]
      %v720 = vld [vmem:[#allocation13 + $0x2d8] sm:$0xff]
      %v721 = vld [vmem:[#allocation13 + $0x2e0] sm:$0xff]
      %v722 = vld [vmem:[#allocation13 + $0x2e8] sm:$0xff]
      %v723 = vld [vmem:[#allocation13 + $0x2f0] sm:$0xff]
      %v724 = vld [vmem:[#allocation13 + $0x2f8] sm:$0xff]
      %v725 = vld [vmem:[#allocation13 + $0x300] sm:$0xff]
      %v726 = vld [vmem:[#allocation13 + $0x308] sm:$0xff]
      %v727 = vld [vmem:[#allocation13 + $0x310] sm:$0xff]
      %v728 = vld [vmem:[#allocation13 + $0x318] sm:$0xff]
      %v729 = vld [vmem:[#allocation13 + $0x320] sm:$0xff]
      %v730 = vld [vmem:[#allocation13 + $0x328] sm:$0xff]
      %v731 = vld [vmem:[#allocation13 + $0x330] sm:$0xff]
      %v732 = vld [vmem:[#allocation13 + $0x338] sm:$0xff]
      %v733 = vld [vmem:[#allocation13 + $0x340] sm:$0xff]
      %v734 = vld [vmem:[#allocation13 + $0x348] sm:$0xff]
      %v735 = vld [vmem:[#allocation13 + $0x350] sm:$0xff]
      %v736 = vld [vmem:[#allocation13 + $0x358] sm:$0xff]
      %v737 = vld [vmem:[#allocation13 + $0x360] sm:$0xff]
      %v738 = vld [vmem:[#allocation13 + $0x368] sm:$0xff]
      %v739 = vld [vmem:[#allocation13 + $0x370] sm:$0xff]
      %v740 = vld [vmem:[#allocation13 + $0x378] sm:$0xff]
      %v741 = vld [vmem:[#allocation13 + $0x380] sm:$0xff]
      %v742 = vld [vmem:[#allocation13 + $0x388] sm:$0xff]
      %v743 = vld [vmem:[#allocation13 + $0x390] sm:$0xff]
      %v744 = vld [vmem:[#allocation13 + $0x398] sm:$0xff]
      %v745 = vld [vmem:[#allocation13 + $0x3a0] sm:$0xff]
      %v746 = vld [vmem:[#allocation13 + $0x3a8] sm:$0xff]
      %v747 = vld [vmem:[#allocation13 + $0x3b0] sm:$0xff]
      %v748 = vld [vmem:[#allocation13 + $0x3b8] sm:$0xff]
      %v749 = vld [vmem:[#allocation13 + $0x3c0] sm:$0xff]
      %v750 = vld [vmem:[#allocation13 + $0x3c8] sm:$0xff]
      %v751 = vld [vmem:[#allocation13 + $0x3d0] sm:$0xff]
      %v752 = vld [vmem:[#allocation13 + $0x3d8] sm:$0xff]
      %v753 = vld [vmem:[#allocation13 + $0x3e0] sm:$0xff]
      %v754 = vld [vmem:[#allocation13 + $0x3e8] sm:$0xff]
      %v755 = vld [vmem:[#allocation13 + $0x3f0] sm:$0xff]
      %v756 = vld [vmem:[#allocation13 + $0x3f8] sm:$0xff]
      %v757 = vld [vmem:[#allocation13 + $0x400] sm:$0xff]
      %v758 = vld [vmem:[#allocation13 + $0x408] sm:$0xff]
      %v759 = vld [vmem:[#allocation13 + $0x410] sm:$0xff]
      %v760 = vld [vmem:[#allocation13 + $0x418] sm:$0xff]
      %v761 = vld [vmem:[#allocation13 + $0x420] sm:$0xff]
      %v762 = vld [vmem:[#allocation13 + $0x428] sm:$0xff]
      %v763 = vld [vmem:[#allocation13 + $0x430] sm:$0xff]
      %v764 = vld [vmem:[#allocation13 + $0x438] sm:$0xff]
      %v765 = vld [vmem:[#allocation13 + $0x440] sm:$0xff]
      %v766 = vld [vmem:[#allocation13 + $0x448] sm:$0xff]
      %v767 = vld [vmem:[#allocation13 + $0x450] sm:$0xff]
      %v768 = vld [vmem:[#allocation13 + $0x458] sm:$0xff]
      %v769 = vld [vmem:[#allocation13 + $0x460] sm:$0xff]
      %v770 = vld [vmem:[#allocation13 + $0x468] sm:$0xff]
      %v771 = vld [vmem:[#allocation13 + $0x470] sm:$0xff]
      %v772 = vld [vmem:[#allocation13 + $0x478] sm:$0xff]
      %v773 = vld [vmem:[#allocation13 + $0x480] sm:$0xff]
      %v774 = vld [vmem:[#allocation13 + $0x488] sm:$0xff]
      %v775 = vld [vmem:[#allocation13 + $0x490] sm:$0xff]
      %v776 = vld [vmem:[#allocation13 + $0x498] sm:$0xff]
      %v777 = vld [vmem:[#allocation13 + $0x4a0] sm:$0xff]
      %v778 = vld [vmem:[#allocation13 + $0x4a8] sm:$0xff]
      %v779 = vld [vmem:[#allocation13 + $0x4b0] sm:$0xff]
      %v780 = vld [vmem:[#allocation13 + $0x4b8] sm:$0xff]
      %v781 = vld [vmem:[#allocation13 + $0x4c0] sm:$0xff]
      %v782 = vld [vmem:[#allocation13 + $0x4c8] sm:$0xff]
      %v783 = vld [vmem:[#allocation13 + $0x4d0] sm:$0xff]
      %v784 = vld [vmem:[#allocation13 + $0x4d8] sm:$0xff]
      %v785 = vld [vmem:[#allocation13 + $0x4e0] sm:$0xff]
      %v786 = vld [vmem:[#allocation13 + $0x4e8] sm:$0xff]
      %v787 = vld [vmem:[#allocation13 + $0x4f0] sm:$0xff]
      %v788 = vld [vmem:[#allocation13 + $0x4f8] sm:$0xff]
      %v789 = vld [vmem:[#allocation13 + $0x500] sm:$0xff]
      %v790 = vld [vmem:[#allocation13 + $0x508] sm:$0xff]
      %v791 = vld [vmem:[#allocation13 + $0x510] sm:$0xff]
      %v792 = vld [vmem:[#allocation13 + $0x518] sm:$0xff]
      %v793 = vld [vmem:[#allocation13 + $0x520] sm:$0xff]
      %v794 = vld [vmem:[#allocation13 + $0x528] sm:$0xff]
      %v795 = vld [vmem:[#allocation13 + $0x530] sm:$0xff]
      %v796 = vld [vmem:[#allocation13 + $0x538] sm:$0xff]
      %v797 = vld [vmem:[#allocation13 + $0x540] sm:$0xff]
      %v798 = vld [vmem:[#allocation13 + $0x548] sm:$0xff]
      %v799 = vld [vmem:[#allocation13 + $0x550] sm:$0xff]
      %v800 = vld [vmem:[#allocation13 + $0x558] sm:$0xff]
      %v801 = vld [vmem:[#allocation13 + $0x560] sm:$0xff]
      %v802 = vld [vmem:[#allocation13 + $0x568] sm:$0xff]
      %v803 = vld [vmem:[#allocation13 + $0x570] sm:$0xff]
      %v804 = vld [vmem:[#allocation13 + $0x578] sm:$0xff]
      %v805 = vld [vmem:[#allocation13 + $0x580] sm:$0xff]
      %v806 = vld [vmem:[#allocation13 + $0x588] sm:$0xff]
      %v807 = vld [vmem:[#allocation13 + $0x590] sm:$0xff]
      %v808 = vld [vmem:[#allocation13 + $0x598] sm:$0xff]
      %v809 = vld [vmem:[#allocation13 + $0x5a0] sm:$0xff]
      %v810 = vld [vmem:[#allocation13 + $0x5a8] sm:$0xff]
      %v811 = vld [vmem:[#allocation13 + $0x5b0] sm:$0xff]
      %v812 = vld [vmem:[#allocation13 + $0x5b8] sm:$0xff]
      %v813 = vld [vmem:[#allocation13 + $0x5c0] sm:$0xff]
      %v814 = vld [vmem:[#allocation13 + $0x5c8] sm:$0xff]
      %v815 = vld [vmem:[#allocation13 + $0x5d0] sm:$0xff]
      %v816 = vld [vmem:[#allocation13 + $0x5d8] sm:$0xff]
      %v817 = vld [vmem:[#allocation13 + $0x5e0] sm:$0xff]
      %v818 = vld [vmem:[#allocation13 + $0x5e8] sm:$0xff]
      %v819 = vld [vmem:[#allocation13 + $0x5f0] sm:$0xff]
      %v820 = vld [vmem:[#allocation13 + $0x5f8] sm:$0xff]
      %v821 = vld [vmem:[#allocation16] sm:$0x3f]
      %v823 = vperm.slane %v617, 0
      %v824 = vperm.slane %v617, 1
      %v828 = vperm.slane %v821, 0
      %v829 = vperm.slane %v821, 1
      %v830 = vperm.slane %v821, 2
      %v831 = vperm.slane %v821, 3
      %v832 = vperm.slane %v821, 4
      %v833 = vperm.slane %v821, 5
      %840 = vmatpush.msra.mxu0 %v719
      %841 = vmatpush.msra.mxu0 %v713
      %842 = vmatpush.msra.mxu0 %v707
      %843 = vmatpush.msra.mxu0 %v701
      %844 = vmatpush.msra.mxu0 %v695
      %845 = vmatpush.msra.mxu0 %v689
      %846 = vmatpush.msra.mxu0 %v683
      %847 = vmatpush.msra.mxu0 %v677
      %848 = vmatpush.msra.mxu0 %v671
      %849 = vmatpush.msra.mxu0 %v665
      %850 = vmatpush.msra.mxu0 %v659
      %851 = vmatpush.msra.mxu0 %v653
      %852 = vmatpush.msra.mxu0 %v647
      %853 = vmatpush.msra.mxu0 %v641
      %854 = vmatpush.msra.mxu0 %v635
      %855 = vmatpush.msra.mxu0 %v629
      %856 = vmatmul.f32.gmra.mxu0 %v823
      %v857 = vpop.f32.mrf.mxu0
      %v858 = vadd.f32 %v828, %v857
      %859 = vdwg.mxu0
      %860 = vmatpush.msra.mxu0 %v815
      %861 = vmatpush.msra.mxu0 %v809
      %862 = vmatpush.msra.mxu0 %v803
      %863 = vmatpush.msra.mxu0 %v797
      %864 = vmatpush.msra.mxu0 %v791
      %865 = vmatpush.msra.mxu0 %v785
      %866 = vmatpush.msra.mxu0 %v779
      %867 = vmatpush.msra.mxu0 %v773
      %868 = vmatpush.msra.mxu0 %v767
      %869 = vmatpush.msra.mxu0 %v761
      %870 = vmatpush.msra.mxu0 %v755
      %871 = vmatpush.msra.mxu0 %v749
      %872 = vmatpush.msra.mxu0 %v743
      %873 = vmatpush.msra.mxu0 %v737
      %874 = vmatpush.msra.mxu0 %v731
      %875 = vmatpush.msra.mxu0 %v725
      %876 = vmatmul.f32.gmra.mxu0 %v824
      %v877 = vpop.f32.mrf.mxu0
      %v878 = vadd.f32 %v858, %v877
      %879 = vdwg.mxu0
      %880 = vmatpush.msra.mxu0 %v720
      %881 = vmatpush.msra.mxu0 %v714
      %882 = vmatpush.msra.mxu0 %v708
      %883 = vmatpush.msra.mxu0 %v702
      %884 = vmatpush.msra.mxu0 %v696
      %885 = vmatpush.msra.mxu0 %v690
      %886 = vmatpush.msra.mxu0 %v684
      %887 = vmatpush.msra.mxu0 %v678
      %888 = vmatpush.msra.mxu0 %v672
      %889 = vmatpush.msra.mxu0 %v666
      %890 = vmatpush.msra.mxu0 %v660
      %891 = vmatpush.msra.mxu0 %v654
      %892 = vmatpush.msra.mxu0 %v648
      %893 = vmatpush.msra.mxu0 %v642
      %894 = vmatpush.msra.mxu0 %v636
      %895 = vmatpush.msra.mxu0 %v630
      %896 = vmatmul.f32.gmra.mxu0 %v823
      %v897 = vpop.f32.mrf.mxu0
      %v898 = vadd.f32 %v829, %v897
      %899 = vdwg.mxu0
      %900 = vmatpush.msra.mxu0 %v816
      %901 = vmatpush.msra.mxu0 %v810
      %902 = vmatpush.msra.mxu0 %v804
      %903 = vmatpush.msra.mxu0 %v798
      %904 = vmatpush.msra.mxu0 %v792
      %905 = vmatpush.msra.mxu0 %v786
      %906 = vmatpush.msra.mxu0 %v780
      %907 = vmatpush.msra.mxu0 %v774
      %908 = vmatpush.msra.mxu0 %v768
      %909 = vmatpush.msra.mxu0 %v762
      %910 = vmatpush.msra.mxu0 %v756
      %911 = vmatpush.msra.mxu0 %v750
      %912 = vmatpush.msra.mxu0 %v744
      %913 = vmatpush.msra.mxu0 %v738
      %914 = vmatpush.msra.mxu0 %v732
      %915 = vmatpush.msra.mxu0 %v726
      %916 = vmatmul.f32.gmra.mxu0 %v824
      %v917 = vpop.f32.mrf.mxu0
      %v918 = vadd.f32 %v898, %v917
      %919 = vdwg.mxu0
      %920 = vmatpush.msra.mxu0 %v721
      %921 = vmatpush.msra.mxu0 %v715
      %922 = vmatpush.msra.mxu0 %v709
      %923 = vmatpush.msra.mxu0 %v703
      %924 = vmatpush.msra.mxu0 %v697
      %925 = vmatpush.msra.mxu0 %v691
      %926 = vmatpush.msra.mxu0 %v685
      %927 = vmatpush.msra.mxu0 %v679
      %928 = vmatpush.msra.mxu0 %v673
      %929 = vmatpush.msra.mxu0 %v667
      %930 = vmatpush.msra.mxu0 %v661
      %931 = vmatpush.msra.mxu0 %v655
      %932 = vmatpush.msra.mxu0 %v649
      %933 = vmatpush.msra.mxu0 %v643
      %934 = vmatpush.msra.mxu0 %v637
      %935 = vmatpush.msra.mxu0 %v631
      %936 = vmatmul.f32.gmra.mxu0 %v823
      %v937 = vpop.f32.mrf.mxu0
      %v938 = vadd.f32 %v830, %v937
      %939 = vdwg.mxu0
      %940 = vmatpush.msra.mxu0 %v817
      %941 = vmatpush.msra.mxu0 %v811
      %942 = vmatpush.msra.mxu0 %v805
      %943 = vmatpush.msra.mxu0 %v799
      %944 = vmatpush.msra.mxu0 %v793
      %945 = vmatpush.msra.mxu0 %v787
      %946 = vmatpush.msra.mxu0 %v781
      %947 = vmatpush.msra.mxu0 %v775
      %948 = vmatpush.msra.mxu0 %v769
      %949 = vmatpush.msra.mxu0 %v763
      %950 = vmatpush.msra.mxu0 %v757
      %951 = vmatpush.msra.mxu0 %v751
      %952 = vmatpush.msra.mxu0 %v745
      %953 = vmatpush.msra.mxu0 %v739
      %954 = vmatpush.msra.mxu0 %v733
      %955 = vmatpush.msra.mxu0 %v727
      %956 = vmatmul.f32.gmra.mxu0 %v824
      %v957 = vpop.f32.mrf.mxu0
      %v958 = vadd.f32 %v938, %v957
      %959 = vdwg.mxu0
      %960 = vmatpush.msra.mxu0 %v722
      %961 = vmatpush.msra.mxu0 %v716
      %962 = vmatpush.msra.mxu0 %v710
      %963 = vmatpush.msra.mxu0 %v704
      %964 = vmatpush.msra.mxu0 %v698
      %965 = vmatpush.msra.mxu0 %v692
      %966 = vmatpush.msra.mxu0 %v686
      %967 = vmatpush.msra.mxu0 %v680
      %968 = vmatpush.msra.mxu0 %v674
      %969 = vmatpush.msra.mxu0 %v668
      %970 = vmatpush.msra.mxu0 %v662
      %971 = vmatpush.msra.mxu0 %v656
      %972 = vmatpush.msra.mxu0 %v650
      %973 = vmatpush.msra.mxu0 %v644
      %974 = vmatpush.msra.mxu0 %v638
      %975 = vmatpush.msra.mxu0 %v632
      %976 = vmatmul.f32.gmra.mxu0 %v823
      %v977 = vpop.f32.mrf.mxu0
      %v978 = vadd.f32 %v831, %v977
      %979 = vdwg.mxu0
      %980 = vmatpush.msra.mxu0 %v818
      %981 = vmatpush.msra.mxu0 %v812
      %982 = vmatpush.msra.mxu0 %v806
      %983 = vmatpush.msra.mxu0 %v800
      %984 = vmatpush.msra.mxu0 %v794
      %985 = vmatpush.msra.mxu0 %v788
      %986 = vmatpush.msra.mxu0 %v782
      %987 = vmatpush.msra.mxu0 %v776
      %988 = vmatpush.msra.mxu0 %v770
      %989 = vmatpush.msra.mxu0 %v764
      %990 = vmatpush.msra.mxu0 %v758
      %991 = vmatpush.msra.mxu0 %v752
      %992 = vmatpush.msra.mxu0 %v746
      %993 = vmatpush.msra.mxu0 %v740
      %994 = vmatpush.msra.mxu0 %v734
      %995 = vmatpush.msra.mxu0 %v728
      %996 = vmatmul.f32.gmra.mxu0 %v824
      %v997 = vpop.f32.mrf.mxu0
      %v998 = vadd.f32 %v978, %v997
      %999 = vdwg.mxu0
      %1000 = vmatpush.msra.mxu0 %v723
      %1001 = vmatpush.msra.mxu0 %v717
      %1002 = vmatpush.msra.mxu0 %v711
      %1003 = vmatpush.msra.mxu0 %v705
      %1004 = vmatpush.msra.mxu0 %v699
      %1005 = vmatpush.msra.mxu0 %v693
      %1006 = vmatpush.msra.mxu0 %v687
      %1007 = vmatpush.msra.mxu0 %v681
      %1008 = vmatpush.msra.mxu0 %v675
      %1009 = vmatpush.msra.mxu0 %v669
      %1010 = vmatpush.msra.mxu0 %v663
      %1011 = vmatpush.msra.mxu0 %v657
      %1012 = vmatpush.msra.mxu0 %v651
      %1013 = vmatpush.msra.mxu0 %v645
      %1014 = vmatpush.msra.mxu0 %v639
      %1015 = vmatpush.msra.mxu0 %v633
      %1016 = vmatmul.f32.gmra.mxu0 %v823
      %v1017 = vpop.f32.mrf.mxu0
      %v1018 = vadd.f32 %v832, %v1017
      %1019 = vdwg.mxu0
      %1020 = vmatpush.msra.mxu0 %v819
      %1021 = vmatpush.msra.mxu0 %v813
      %1022 = vmatpush.msra.mxu0 %v807
      %1023 = vmatpush.msra.mxu0 %v801
      %1024 = vmatpush.msra.mxu0 %v795
      %1025 = vmatpush.msra.mxu0 %v789
      %1026 = vmatpush.msra.mxu0 %v783
      %1027 = vmatpush.msra.mxu0 %v777
      %1028 = vmatpush.msra.mxu0 %v771
      %1029 = vmatpush.msra.mxu0 %v765
      %1030 = vmatpush.msra.mxu0 %v759
      %1031 = vmatpush.msra.mxu0 %v753
      %1032 = vmatpush.msra.mxu0 %v747
      %1033 = vmatpush.msra.mxu0 %v741
      %1034 = vmatpush.msra.mxu0 %v735
      %1035 = vmatpush.msra.mxu0 %v729
      %1036 = vmatmul.f32.gmra.mxu0 %v824
      %v1037 = vpop.f32.mrf.mxu0
      %v1038 = vadd.f32 %v1018, %v1037
      %1039 = vdwg.mxu0
      %1040 = vmatpush.msra.mxu0 %v724
      %1041 = vmatpush.msra.mxu0 %v718
      %1042 = vmatpush.msra.mxu0 %v712
      %1043 = vmatpush.msra.mxu0 %v706
      %1044 = vmatpush.msra.mxu0 %v700
      %1045 = vmatpush.msra.mxu0 %v694
      %1046 = vmatpush.msra.mxu0 %v688
      %1047 = vmatpush.msra.mxu0 %v682
      %1048 = vmatpush.msra.mxu0 %v676
      %1049 = vmatpush.msra.mxu0 %v670
      %1050 = vmatpush.msra.mxu0 %v664
      %1051 = vmatpush.msra.mxu0 %v658
      %1052 = vmatpush.msra.mxu0 %v652
      %1053 = vmatpush.msra.mxu0 %v646
      %1054 = vmatpush.msra.mxu0 %v640
      %1055 = vmatpush.msra.mxu0 %v634
      %1056 = vmatmul.f32.gmra.mxu0 %v823
      %v1057 = vpop.f32.mrf.mxu0
      %v1058 = vadd.f32 %v833, %v1057
      %1059 = vdwg.mxu0
      %1060 = vmatpush.msra.mxu0 %v820
      %1061 = vmatpush.msra.mxu0 %v814
      %1062 = vmatpush.msra.mxu0 %v808
      %1063 = vmatpush.msra.mxu0 %v802
      %1064 = vmatpush.msra.mxu0 %v796
      %1065 = vmatpush.msra.mxu0 %v790
      %1066 = vmatpush.msra.mxu0 %v784
      %1067 = vmatpush.msra.mxu0 %v778
      %1068 = vmatpush.msra.mxu0 %v772
      %1069 = vmatpush.msra.mxu0 %v766
      %1070 = vmatpush.msra.mxu0 %v760
      %1071 = vmatpush.msra.mxu0 %v754
      %1072 = vmatpush.msra.mxu0 %v748
      %1073 = vmatpush.msra.mxu0 %v742
      %1074 = vmatpush.msra.mxu0 %v736
      %1075 = vmatpush.msra.mxu0 %v730
      %1076 = vmatmul.f32.gmra.mxu0 %v824
      %v1077 = vpop.f32.mrf.mxu0
      %v1078 = vadd.f32 %v1058, %v1077
      %1079 = vdwg.mxu0
      %v1082 = vrot.slane %v918, 7
      %vm1083 = vcmask 1040384
      %v1084 = vsel %vm1083, %v878, %v1082
      %v1086 = vadd.f32 %v628, %v1084
      %v1087 = vxor.u32 %v1086, 2147483648
      %v1088 = vmul.f32 %v1087, 1.442695
      %v1089 = vpow.pop %v1088
      %v1090 = vadd.f32 %v1089, 1.0
      %v1091 = vrcp.pop %v1090
      %v1092 = vmul.f32 %v1090, %v1091
      %v1093 = vsub.f32 1.0, %v1092
      %v1094 = vmul.f32 %v1091, %v1093
      %v1095 = vadd.f32 %v1091, %v1094
      %vm1096 = vweird.f32 %v1090
      %vm1097 = vweird.f32 %v1091
      %vm1098 = vmor %vm1096, %vm1097
      %v1099 = vsel %vm1098, %v1091, %v1095
      %v1100 = vand.u32 2147483647, %v1090
      %vm1101 = vcmp.eq.f32.partialorder %v1100, 8.507059e+37
      %v1102 = vand.u32 %v1090, 2147483648
      %v1103 = vor.u32 1.1754944e-38, %v1102
      %v1104 = vsel %vm1101, %v1103, %v1099
      %v1105 = vmul.f32 1.0, %v1104
      %v1107 = vrot.slane %v628, 2
      %v1111 = vrot.slane %v998, 7
      %v1112 = vsel %vm1083, %v958, %v1111
      %v1114 = vadd.f32 %v1107, %v1112
      %v1115 = vxor.u32 %v1114, 2147483648
      %v1116 = vmul.f32 %v1115, 1.442695
      %v1117 = vpow.pop %v1116
      %v1118 = vadd.f32 %v1117, 1.0
      %v1119 = vrcp.pop %v1118
      %v1120 = vmul.f32 %v1118, %v1119
      %v1121 = vsub.f32 1.0, %v1120
      %v1122 = vmul.f32 %v1119, %v1121
      %v1123 = vadd.f32 %v1119, %v1122
      %vm1124 = vweird.f32 %v1118
      %vm1125 = vweird.f32 %v1119
      %vm1126 = vmor %vm1124, %vm1125
      %v1127 = vsel %vm1126, %v1119, %v1123
      %v1128 = vand.u32 2147483647, %v1118
      %vm1129 = vcmp.eq.f32.partialorder %v1128, 8.507059e+37
      %v1130 = vand.u32 %v1118, 2147483648
      %v1131 = vor.u32 1.1754944e-38, %v1130
      %v1132 = vsel %vm1129, %v1131, %v1127
      %v1133 = vmul.f32 1.0, %v1132
      %v1136 = vrot.slane %v1078, 7
      %v1137 = vsel %vm1083, %v1038, %v1136
      %v1139 = vmul.f32 %v1105, %v1137
      %v1140 = vrot.slane %v628, 4
      %v1142 = vadd.f32 %v1140, %v1139
      %v1143 = vtanh.pop %v1142
      %v1144 = vsub.f32 1.0, %v1133
      %v1145 = vmul.f32 %v1144, %v1143
      %v1146 = vmul.f32 %v1133, %v617
      %v1147 = vadd.f32 %v1145, %v1146
      %s1148 = smul.u32 %s618, 2
      %s1149 = smul.u32 %s1148, 8
      %s1150 = sadd.s32 %s1149, %s621
      %s1151 = scalar_lea.vmem [#allocation18], %s1150
      %1152 = vst.msk [vmem:[%s1151] ss:$8 sm:$0x3] %vm609, %v1147
      %1153 = vst.msk [vmem:[%s1151] ss:$8 sm:$0x0] %vm609, %v1147
      %1154 = vst.msk [vmem:[#allocation4] sm:$0x3] %vm609, %v1147
    $region61: #{tpu_custom_call.1} parent=1 // loop_footer
      %s616 = sadd.s32 1, %s612
    $region62: #{tpu_custom_call.1} parent=1 // loop_footer_branch
      %611 = sbr.rel target = $region58
    $region63: #{tpu_custom_call.1} parent=1 // loop_exit
      _
    // Predicated region
    $region64: #{tpu_custom_call.1} parent=1 // pred_check
      _
    $region65: #{tpu_custom_call.1} parent=1 // pred_check_branch
      %1156 = sbr.rel (0) target = $region67
    $region66: #{tpu_custom_call.1} parent=1 // pred_region
      %1158 = vsyncadd [#allocation9], 0
      %s1160 = sshll.u32 [#allocation18], 4
      %s1161 = int_to_ptr.vmem [resolvable:$true] %s1160
      %s1162 = sshll.u32 %s7, 4
      %s1163 = int_to_ptr.hbm [resolvable:$true] %s1162
      %1165 = dma.vmem_to_hbm [thread:$0]  %s1161, 256, %s1163, [#allocation9]
    $region67: #{tpu_custom_call.1} parent=1 // pred_fallthru
      _
    // Predicated region
    $region68: #{tpu_custom_call.1} parent=1 // pred_check
      _
    $region69: #{tpu_custom_call.1} parent=1 // pred_check_branch
      %1167 = sbr.rel (0) target = $region71
    $region70: #{tpu_custom_call.1} parent=1 // pred_region
      %1169 = dma.done [#allocation9], 256
    $region71: #{tpu_custom_call.1} parent=1 // pred_fallthru
      _
    %1170 = vsyncpa [#allocation8], 1
    %1171 = vsyncpa [#allocation11], 1
    %1172 = vsyncpa [#allocation14], 1
    %1173 = vsyncpa [#allocation17], 1
    %1174 = vsyncpa [#allocation9], 1

</llo_original>
